<compile_context>
chip_gen: v6e
topology: v6e:2x2x1
jax: 0.10.0
libtpu: 0.0.40
codegen_flags: <defaults>
</compile_context>

<pallas_src>
import functools

import jax
import jax.numpy as jnp
from jax.experimental import pallas as pl
from jax.experimental.pallas import tpu as pltpu

N_CHANNELS = 512            # nChannels is hard-coded to 512 in the PyTorch module
_LANE = 128                 # lane-density requirement for the last (class) dim
_MAX_SINGLE_TILE_CLASSES = 4096   # one class tile up to here (bf16 weight tile <= 4 MiB)
_X_BLOCK_BUDGET = 4 << 20   # soft cap (bytes) for the pooled-path f32 activation block
_VMEM_SLACK = 4 << 20       # headroom on top of the accounted double-buffered blocks


def _round_up(x, m):
    return ((x + m - 1) // m) * m


def _class_padding(n_classes):
    """Pad the class dim to a lane-dense size; single tile for typical sizes."""
    if n_classes <= _MAX_SINGLE_TILE_CLASSES:
        return _round_up(n_classes, _LANE)
    return _round_up(n_classes, _MAX_SINGLE_TILE_CLASSES)


def _class_tile(n_pad):
    return n_pad if n_pad <= _MAX_SINGLE_TILE_CLASSES else _MAX_SINGLE_TILE_CLASSES


def _batch_tile(B, bytes_per_sample):
    """Largest batch tile whose f32 activation block fits the soft VMEM budget.

    Must be a multiple of 8 (sublane constraint on the (tb, n_pad) output block)
    unless it covers the whole batch.
    """
    if B * bytes_per_sample <= _X_BLOCK_BUDGET:
        return B
    fit = max(1, _X_BLOCK_BUDGET // max(1, bytes_per_sample))
    tb = (fit // 8) * 8
    if tb == 0:
        # A single sample already exceeds the soft budget; take the smallest
        # legal tile and let vmem_limit_bytes absorb it.
        # TODO(synk): chunk the spatial axis (grid over HW with a (tb, C) VMEM
        # accumulator + pl.when init/finalize) if one sample's feature map ever
        # exceeds the per-generation VMEM budget.
        tb = min(8, B)
    return min(tb, B)


# ---------------- Pallas kernels ----------------

def _linear_kernel(x_ref, w_ref, b_ref, o_ref):
    # x: (B, C) f32   w: (C, TN) bf16   b: (1, TN) f32   o: (B, TN) f32
    # Cast only the tiny x operand to bf16; the MXU runs the native bf16 path
    # with f32 accumulation (no full-tile VPU upcast of the weights).
    xb = x_ref[...].astype(jnp.bfloat16)
    o_ref[...] = (
        jnp.dot(xb, w_ref[...], preferred_element_type=jnp.float32) + b_ref[...]
    )


def _pool_linear_kernel(x_ref, w_ref, b_ref, o_ref, *, inv_hw):
    # x: (TB, C, HW) f32 (NCHW with the spatial extent flattened onto the lane
    # axis).  Global average pool = lane-axis sum (XLU) + one scale on the tiny
    # (TB, C) result, kept in f32; cast to bf16 only immediately before the MXU.
    pooled = jnp.sum(x_ref[...], axis=-1) * inv_hw           # (TB, C) f32
    pooled = pooled.astype(jnp.bfloat16)
    o_ref[...] = (
        jnp.dot(pooled, w_ref[...], preferred_element_type=jnp.float32) + b_ref[...]
    )


# ---------------- wrappers (pallas_call glue) ----------------

@jax.jit
def _linear_call(x, w_t, b2d):
    B, C = x.shape
    n_pad = w_t.shape[1]
    tn = _class_tile(n_pad)
    nc = n_pad // tn            # == 1 for n_classes <= 4096 (single grid step)

    # Explicit VMEM budget: every block double-buffered + slack.
    vmem = (2 * B * C * 4) + (2 * C * tn * 2) + (2 * tn * 4) + (2 * B * tn * 4) + _VMEM_SLACK

    # NOTE: with nc == 1 (the typical case) there is no pipelining; if nc > 1,
    # the constant-index x block could additionally use pipeline_mode=Buffered(1).
    return pl.pallas_call(
        _linear_kernel,
        out_shape=jax.ShapeDtypeStruct((B, n_pad), jnp.float32),
        grid=(nc,),
        in_specs=[
            pl.BlockSpec((B, C), lambda j: (0, 0)),
            pl.BlockSpec((C, tn), lambda j: (0, j)),
            pl.BlockSpec((1, tn), lambda j: (0, j)),
        ],
        out_specs=pl.BlockSpec((B, tn), lambda j: (0, j)),
        compiler_params=pltpu.CompilerParams(
            dimension_semantics=("parallel",),
            vmem_limit_bytes=int(vmem),
        ),
    )(x, w_t, b2d)


@jax.jit
def _pool_linear_call(x_bcs, w_t, b2d):
    B, C, HW = x_bcs.shape
    n_pad = w_t.shape[1]
    tn = _class_tile(n_pad)
    nc = n_pad // tn                       # usually 1
    tb = _batch_tile(B, C * HW * 4)        # batch tile capped by activation budget
    nb = (B + tb - 1) // tb

    vmem = (
        (2 * tb * C * HW * 4)              # x blocks (double-buffered)
        + (2 * C * tn * 2)                 # bf16 weight tile
        + (2 * tn * 4)                     # bias tile
        + (2 * tb * tn * 4)                # output tile
        + _VMEM_SLACK
    )

    kernel = functools.partial(_pool_linear_kernel, inv_hw=1.0 / HW)

    # Class axis is the OUTER grid dim: the weight block index is constant
    # across the inner batch sweep, so weights (the dominant HBM traffic) are
    # DMA'd once per class tile, never once per batch tile.
    return pl.pallas_call(
        kernel,
        out_shape=jax.ShapeDtypeStruct((B, n_pad), jnp.float32),
        grid=(nc, nb),
        in_specs=[
            pl.BlockSpec((tb, C, HW), lambda c, b: (b, 0, 0)),
            pl.BlockSpec((C, tn), lambda c, b: (0, c)),
            pl.BlockSpec((1, tn), lambda c, b: (0, c)),
        ],
        out_specs=pl.BlockSpec((tb, tn), lambda c, b: (b, c)),
        compiler_params=pltpu.CompilerParams(
            dimension_semantics=("parallel", "parallel"),
            vmem_limit_bytes=int(vmem),
        ),
    )(x_bcs, w_t, b2d)


class LinearClassifierResNet:
    """JAX/Pallas port of the PyTorch LinearClassifierResNet."""

    def __init__(self, layer=6, n_classes=1000, *, key=None):
        self.layer = layer
        self.n_classes = n_classes
        if key is None:
            key = jax.random.PRNGKey(0)
        # nn.Linear(512, n_classes): weight (n_classes, 512), bias (n_classes,)
        # initilize(): weight ~ N(0, 0.01), bias = 0   (true f32 parameters)
        self.weight = 0.01 * jax.random.normal(
            key, (n_classes, N_CHANNELS), dtype=jnp.float32
        )
        self.bias = jnp.zeros((n_classes,), dtype=jnp.float32)

        n_pad = _class_padding(n_classes)
        # Pre-transpose + zero-pad the class dim to a lane-dense multiple of 128.
        # Weights are streamed as bf16 (halves the dominant HBM traffic); the
        # matmul accumulates in f32 on the MXU.  Quantization error vs the true
        # f32 weights is validated in __main__ with an explicit tolerance.
        w_t = jnp.zeros((N_CHANNELS, n_pad), jnp.float32)
        w_t = w_t.at[:, :n_classes].set(self.weight.T)
        self._w_t = w_t.astype(jnp.bfloat16)
        self._b2d = jnp.zeros((1, n_pad), jnp.float32).at[:, :n_classes].set(self.bias)

    def __call__(self, x):
        if self.layer < 6:
            # x is NCHW: (B, C, H, W) -> (B, C, H*W); a free reshape, no transpose.
            B, C, H, W = x.shape
            assert C == N_CHANNELS
            out = _pool_linear_call(x.reshape(B, C, H * W), self._w_t, self._b2d)
            out = out[:, : self.n_classes]
            if B == 1:
                out = out[0]  # mimic PyTorch .squeeze() dropping the batch dim
            return out
        # layer >= 6: x already flattened to (..., 512)
        assert x.shape[-1] == N_CHANNELS
        out = _linear_call(x, self._w_t, self._b2d)
        return out[:, : self.n_classes]

    # ---- references for correctness checking ----

    def reference_f32(self, x):
        """PyTorch semantics with the true (unquantized) f32 weights."""
        if self.layer < 6:
            x = jnp.mean(x, axis=(2, 3))
        out = jnp.dot(x, self.weight.T, precision=jax.lax.Precision.HIGHEST) + self.bias
        if self.layer < 6 and out.shape[0] == 1:
            out = out[0]
        return out

    def reference_bf16(self, x):
        """Mimics the kernel numerics (bf16 operands, f32 accumulation)."""
        if self.layer < 6:
            x = jnp.mean(x, axis=(2, 3))
        w = self._w_t[:, : self.n_classes]
        out = jnp.dot(
            x.astype(jnp.bfloat16), w, preferred_element_type=jnp.float32
        ) + self.bias
        if self.layer < 6 and out.shape[0] == 1:
            out = out[0]
        return out


if __name__ == "__main__":
    key = jax.random.PRNGKey(0)
    k_w, k_x1, k_x2, k_x3 = jax.random.split(key, 4)

    n_classes = 1000  # PyTorch default; class dim padded to 1024 (multiple of 128)

    # --- path 1: layer=6 (no pooling), x: (B, 512) ---
    model6 = LinearClassifierResNet(layer=6, n_classes=n_classes, key=k_w)
    x_flat = jax.random.normal(k_x1, (8, N_CHANNELS), dtype=jnp.float32)
    out6 = jax.block_until_ready(model6(x_flat))
    assert out6.shape == (8, n_classes)
    # strict: kernel mechanics vs an identically-quantized XLA reference
    assert jnp.allclose(out6, model6.reference_bf16(x_flat), atol=1e-4, rtol=1e-4)
    # quantization-aware: vs the true f32 weights (bf16 W and bf16 x, f32 accum)
    assert jnp.allclose(out6, model6.reference_f32(x_flat), atol=5e-3, rtol=5e-3)

    # --- path 2: layer<6 (global avg-pool then linear), x: (B, 512, 16, 16) NCHW ---
    model5 = LinearClassifierResNet(layer=5, n_classes=n_classes, key=k_w)
    x_nchw = jax.random.normal(k_x2, (2, N_CHANNELS, 16, 16), dtype=jnp.float32)
    out5 = jax.block_until_ready(model5(x_nchw))
    assert out5.shape == (2, n_classes)
    assert jnp.allclose(out5, model5.reference_bf16(x_nchw), atol=1e-4, rtol=1e-4)
    assert jnp.allclose(out5, model5.reference_f32(x_nchw), atol=5e-3, rtol=5e-3)

    # --- path 3: layer<6 with B=1 (PyTorch .squeeze() drops the batch dim) ---
    x_b1 = jax.random.normal(k_x3, (1, N_CHANNELS, 8, 8), dtype=jnp.float32)
    out1 = jax.block_until_ready(model5(x_b1))
    assert out1.shape == (n_classes,)
    assert jnp.allclose(out1, model5.reference_bf16(x_b1), atol=1e-4, rtol=1e-4)
    assert jnp.allclose(out1, model5.reference_f32(x_b1), atol=5e-3, rtol=5e-3)

    print("KERNEL_OK")
</pallas_src>

<mosaic_0001>
module attributes {stable_mosaic.version = 11 : i64} {
  func.func @_linear_kernel(%arg0: i32, %arg1: memref<8x512xf32, #tpu.memory_space<vmem>>, %arg2: memref<512x1024xbf16, #tpu.memory_space<vmem>>, %arg3: memref<1x1024xf32, #tpu.memory_space<vmem>>, %arg4: memref<8x1024xf32, #tpu.memory_space<vmem>>) attributes {dimension_semantics = [#tpu.dimension_semantics<parallel>], iteration_bounds = array<i64: 1>, scalar_prefetch = 0 : i64, scratch_operands = 0 : i64, tpu.core_type = #tpu.core_type<tc>, window_params = [{pipeline_mode = #tpu.pipeline_mode<synchronous>, transform_indices = @transform_0, window_bounds = array<i64: 8, 512>}, {transform_indices = @transform_1, window_bounds = array<i64: 512, 1024>}, {transform_indices = @transform_2, window_bounds = array<i64: 1, 1024>}, {transform_indices = @transform_3, window_bounds = array<i64: 8, 1024>}]} {
    %c0 = arith.constant 0 : index
    %c0_0 = arith.constant 0 : index
    %0 = vector.load %arg1[%c0, %c0_0] : memref<8x512xf32, #tpu.memory_space<vmem>>, vector<8x512xf32>
    %1 = arith.truncf %0 : vector<8x512xf32> to vector<8x512xbf16>
    %c0_1 = arith.constant 0 : index
    %c0_2 = arith.constant 0 : index
    %2 = vector.load %arg2[%c0_1, %c0_2] : memref<512x1024xbf16, #tpu.memory_space<vmem>>, vector<512x1024xbf16>
    %cst = arith.constant dense<0.000000e+00> : vector<8x1024xf32>
    %3 = tpu.matmul %1, %2, %cst {dimension_numbers = #tpu.dot_dimension_numbers<[1], [0], [0], [1], [0, 0, 1, 1], [], []>} : vector<8x512xbf16>, vector<512x1024xbf16>, vector<8x1024xf32> -> vector<8x1024xf32>
    %c0_3 = arith.constant 0 : index
    %c0_4 = arith.constant 0 : index
    %4 = vector.load %arg3[%c0_3, %c0_4] : memref<1x1024xf32, #tpu.memory_space<vmem>>, vector<1x1024xf32>
    %5 = vector.broadcast %4 : vector<1x1024xf32> to vector<8x1024xf32>
    %6 = arith.addf %3, %5 : vector<8x1024xf32>
    %c0_5 = arith.constant 0 : index
    %c0_6 = arith.constant 0 : index
    %7 = vector.load %arg4[%c0_5, %c0_6] : memref<8x1024xf32, #tpu.memory_space<vmem>>, vector<8x1024xf32>
    tpu.vector_store %arg4[%c0_5, %c0_6], %6 {strides = array<i32>} : memref<8x1024xf32, #tpu.memory_space<vmem>>, vector<8x1024xf32>,
    return
  }
  func.func @transform_0(%arg0: i32) -> (i32, i32) {
    %c0_i32 = arith.constant 0 : i32
    %c0_i32_0 = arith.constant 0 : i32
    %c0_i32_1 = arith.constant 0 : i32
    return %c0_i32, %c0_i32_0 : i32, i32
  }
  func.func @transform_1(%arg0: i32) -> (i32, i32) {
    %c0_i32 = arith.constant 0 : i32
    %c0_i32_0 = arith.constant 0 : i32
    return %c0_i32, %arg0 : i32, i32
  }
  func.func @transform_2(%arg0: i32) -> (i32, i32) {
    %c0_i32 = arith.constant 0 : i32
    %c0_i32_0 = arith.constant 0 : i32
    return %c0_i32, %arg0 : i32, i32
  }
  func.func @transform_3(%arg0: i32) -> (i32, i32) {
    %c0_i32 = arith.constant 0 : i32
    %c0_i32_0 = arith.constant 0 : i32
    return %c0_i32, %arg0 : i32, i32
  }
}

</mosaic_0001>

<llo_original>
// kernel: _linear_call.1
$region0: #{_linear_call.1}
  #allocation0 [shape = 'u32[]', space=smem, size = 0x4, offset = 0x4, fixed_abs, tag = 'smem constant byte address 0x4 - core index']
  #allocation1 [shape = 'u32[144,128]{1,0:T(1,128)}', space=vmem, size = 0x12000, scoped, tag = 'internal scratch']
  %s0 = inlined_call_operand.hbm [shape: f32[8,512], index: 0, kind: input, shape index: {}]
  %s1 = inlined_call_operand.hbm [shape: bf16[512,1024], index: 1, kind: input, shape index: {}]
  %s2 = inlined_call_operand.hbm [shape: f32[1,1024], index: 2, kind: input, shape index: {}]
  %s3 = inlined_call_operand.hbm [shape: f32[8,1024], index: 3, kind: output, shape index: {}]
  %s4 = sld [smem:[#allocation0]]
  $region34: #{_linear_call.1} parent=0
    _
  %s6 = ssub.s32 1, %s4
  %s7 = scalar_select 0, %s6, %s4
  $region1: #{_linear_call.1} parent=0
    #allocation2 [shape = 'u8[16384]{0}', space=vmem, size = 0x4000, scoped, tag = 'input window, operand 0, single buffered']
    #allocation3 [shape = 's32[1]{0}', space=sflag, size = 0x4, scoped, tag = 'scoped memory for _linear_call.1']
    #allocation4 [shape = 's32[1]{0}', space=sflag, size = 0x4, scoped, tag = 'scoped memory for _linear_call.1']
    #allocation5 [shape = 'u8[1048576]{0}', space=vmem, size = 0x100000, scoped, tag = 'input window, operand 1, single buffered']
    #allocation6 [shape = 's32[1]{0}', space=sflag, size = 0x4, scoped, tag = 'scoped memory for _linear_call.1']
    #allocation7 [shape = 'u8[4096]{0}', space=vmem, size = 0x1000, scoped, tag = 'input window, operand 2, single buffered']
    #allocation8 [shape = 'u8[32768]{0}', space=vmem, size = 0x8000, scoped, tag = 'output window, operand 0, single buffered']
    %8 = vsyncpa [#allocation3], 0
    %9 = vsyncpa [#allocation6], 0
    %10 = vsyncpa [#allocation4], 0
    // Predicated region
    $region2: #{_linear_call.1} parent=1 // pred_check
      _
    $region3: #{_linear_call.1} parent=1 // pred_check_branch
      %12 = sbr.rel (0) target = $region5
    $region4: #{_linear_call.1} parent=1 // pred_region
      %s14 = ssub.s32 512, 512
      %15 = vsyncadd [#allocation3], %s14
      %s17 = sshll.u32 [#allocation2], 4
      %s18 = int_to_ptr.vmem [resolvable:$true] %s17
      %20 = dma.hbm_to_vmem [thread:$0]  %s0, 512, %s18, [#allocation3]
    $region5: #{_linear_call.1} parent=1 // pred_fallthru
      _
    // Predicated region
    $region6: #{_linear_call.1} parent=1 // pred_check
      _
    $region7: #{_linear_call.1} parent=1 // pred_check_branch
      %22 = sbr.rel (0) target = $region9
    $region8: #{_linear_call.1} parent=1 // pred_region
      %s24 = ssub.s32 32768, 32768
      %25 = vsyncadd [#allocation6], %s24
      %s26 = sshll.u32 [#allocation5], 4
      %s27 = int_to_ptr.vmem [resolvable:$true] %s26
      %32 = dma.hbm_to_vmem [thread:$0]  %s1, 32768, %s27, [#allocation6], 512, 512, 32
    $region9: #{_linear_call.1} parent=1 // pred_fallthru
      _
    // Predicated region
    $region10: #{_linear_call.1} parent=1 // pred_check
      _
    $region11: #{_linear_call.1} parent=1 // pred_check_branch
      %34 = sbr.rel (0) target = $region13
    $region12: #{_linear_call.1} parent=1 // pred_region
      %s36 = ssub.s32 128, 128
      %37 = vsyncadd [#allocation6], %s36
      %s39 = sshll.u32 [#allocation7], 4
      %s40 = int_to_ptr.vmem [resolvable:$true] %s39
      %42 = dma.hbm_to_vmem [thread:$0]  %s2, 128, %s40, [#allocation6]
    $region13: #{_linear_call.1} parent=1 // pred_fallthru
      _
    // Predicated region
    $region14: #{_linear_call.1} parent=1 // pred_check
      _
    $region15: #{_linear_call.1} parent=1 // pred_check_branch
      %44 = sbr.rel (0) target = $region17
    $region16: #{_linear_call.1} parent=1 // pred_region
      %45 = dma.done [#allocation3], 512
    $region17: #{_linear_call.1} parent=1 // pred_fallthru
      _
    // Predicated region
    $region18: #{_linear_call.1} parent=1 // pred_check
      _
    $region19: #{_linear_call.1} parent=1 // pred_check_branch
      %47 = sbr.rel (0) target = $region21
    $region20: #{_linear_call.1} parent=1 // pred_region
      %48 = dma.done [#allocation6], 32768
    $region21: #{_linear_call.1} parent=1 // pred_fallthru
      _
    // Predicated region
    $region22: #{_linear_call.1} parent=1 // pred_check
      _
    $region23: #{_linear_call.1} parent=1 // pred_check_branch
      %50 = sbr.rel (0) target = $region25
    $region24: #{_linear_call.1} parent=1 // pred_region
      %51 = dma.done [#allocation6], 128
    $region25: #{_linear_call.1} parent=1 // pred_fallthru
      _
    %v52 = vld [vmem:[#allocation2] sm:$0xff]
    %v53 = vld [vmem:[#allocation2 + $0x8] sm:$0xff]
    %v54 = vld [vmem:[#allocation2 + $0x10] sm:$0xff]
    %v55 = vld [vmem:[#allocation2 + $0x18] sm:$0xff]
    %v56 = vpack.c.bf16 %v52, %v52
    %v57 = vpack.c.bf16 %v53, %v53
    %v58 = vpack.c.bf16 %v54, %v54
    %v59 = vpack.c.bf16 %v55, %v55
    %v60 = vld [vmem:[#allocation5] sm:$0xff]
    %v61 = vld [vmem:[#allocation5 + $0x8] sm:$0xff]
    %v62 = vld [vmem:[#allocation5 + $0x10] sm:$0xff]
    %v63 = vld [vmem:[#allocation5 + $0x18] sm:$0xff]
    %v64 = vld [vmem:[#allocation5 + $0x20] sm:$0xff]
    %v65 = vld [vmem:[#allocation5 + $0x28] sm:$0xff]
    %v66 = vld [vmem:[#allocation5 + $0x30] sm:$0xff]
    %v67 = vld [vmem:[#allocation5 + $0x38] sm:$0xff]
    %v68 = vld [vmem:[#allocation5 + $0x40] sm:$0xff]
    %v69 = vld [vmem:[#allocation5 + $0x48] sm:$0xff]
    %v70 = vld [vmem:[#allocation5 + $0x50] sm:$0xff]
    %v71 = vld [vmem:[#allocation5 + $0x58] sm:$0xff]
    %v72 = vld [vmem:[#allocation5 + $0x60] sm:$0xff]
    %v73 = vld [vmem:[#allocation5 + $0x68] sm:$0xff]
    %v74 = vld [vmem:[#allocation5 + $0x70] sm:$0xff]
    %v75 = vld [vmem:[#allocation5 + $0x78] sm:$0xff]
    %v76 = vld [vmem:[#allocation5 + $0x80] sm:$0xff]
    %v77 = vld [vmem:[#allocation5 + $0x88] sm:$0xff]
    %v78 = vld [vmem:[#allocation5 + $0x90] sm:$0xff]
    %v79 = vld [vmem:[#allocation5 + $0x98] sm:$0xff]
    %v80 = vld [vmem:[#allocation5 + $0xa0] sm:$0xff]
    %v81 = vld [vmem:[#allocation5 + $0xa8] sm:$0xff]
    %v82 = vld [vmem:[#allocation5 + $0xb0] sm:$0xff]
    %v83 = vld [vmem:[#allocation5 + $0xb8] sm:$0xff]
    %v84 = vld [vmem:[#allocation5 + $0xc0] sm:$0xff]
    %v85 = vld [vmem:[#allocation5 + $0xc8] sm:$0xff]
    %v86 = vld [vmem:[#allocation5 + $0xd0] sm:$0xff]
    %v87 = vld [vmem:[#allocation5 + $0xd8] sm:$0xff]
    %v88 = vld [vmem:[#allocation5 + $0xe0] sm:$0xff]
    %v89 = vld [vmem:[#allocation5 + $0xe8] sm:$0xff]
    %v90 = vld [vmem:[#allocation5 + $0xf0] sm:$0xff]
    %v91 = vld [vmem:[#allocation5 + $0xf8] sm:$0xff]
    %v92 = vld [vmem:[#allocation5 + $0x100] sm:$0xff]
    %v93 = vld [vmem:[#allocation5 + $0x108] sm:$0xff]
    %v94 = vld [vmem:[#allocation5 + $0x110] sm:$0xff]
    %v95 = vld [vmem:[#allocation5 + $0x118] sm:$0xff]
    %v96 = vld [vmem:[#allocation5 + $0x120] sm:$0xff]
    %v97 = vld [vmem:[#allocation5 + $0x128] sm:$0xff]
    %v98 = vld [vmem:[#allocation5 + $0x130] sm:$0xff]
    %v99 = vld [vmem:[#allocation5 + $0x138] sm:$0xff]
    %v100 = vld [vmem:[#allocation5 + $0x140] sm:$0xff]
    %v101 = vld [vmem:[#allocation5 + $0x148] sm:$0xff]
    %v102 = vld [vmem:[#allocation5 + $0x150] sm:$0xff]
    %v103 = vld [vmem:[#allocation5 + $0x158] sm:$0xff]
    %v104 = vld [vmem:[#allocation5 + $0x160] sm:$0xff]
    %v105 = vld [vmem:[#allocation5 + $0x168] sm:$0xff]
    %v106 = vld [vmem:[#allocation5 + $0x170] sm:$0xff]
    %v107 = vld [vmem:[#allocation5 + $0x178] sm:$0xff]
    %v108 = vld [vmem:[#allocation5 + $0x180] sm:$0xff]
    %v109 = vld [vmem:[#allocation5 + $0x188] sm:$0xff]
    %v110 = vld [vmem:[#allocation5 + $0x190] sm:$0xff]
    %v111 = vld [vmem:[#allocation5 + $0x198] sm:$0xff]
    %v112 = vld [vmem:[#allocation5 + $0x1a0] sm:$0xff]
    %v113 = vld [vmem:[#allocation5 + $0x1a8] sm:$0xff]
    %v114 = vld [vmem:[#allocation5 + $0x1b0] sm:$0xff]
    %v115 = vld [vmem:[#allocation5 + $0x1b8] sm:$0xff]
    %v116 = vld [vmem:[#allocation5 + $0x1c0] sm:$0xff]
    %v117 = vld [vmem:[#allocation5 + $0x1c8] sm:$0xff]
    %v118 = vld [vmem:[#allocation5 + $0x1d0] sm:$0xff]
    %v119 = vld [vmem:[#allocation5 + $0x1d8] sm:$0xff]
    %v120 = vld [vmem:[#allocation5 + $0x1e0] sm:$0xff]
    %v121 = vld [vmem:[#allocation5 + $0x1e8] sm:$0xff]
    %v122 = vld [vmem:[#allocation5 + $0x1f0] sm:$0xff]
    %v123 = vld [vmem:[#allocation5 + $0x1f8] sm:$0xff]
    %v124 = vld [vmem:[#allocation5 + $0x200] sm:$0xff]
    %v125 = vld [vmem:[#allocation5 + $0x208] sm:$0xff]
    %v126 = vld [vmem:[#allocation5 + $0x210] sm:$0xff]
    %v127 = vld [vmem:[#allocation5 + $0x218] sm:$0xff]
    %v128 = vld [vmem:[#allocation5 + $0x220] sm:$0xff]
    %v129 = vld [vmem:[#allocation5 + $0x228] sm:$0xff]
    %v130 = vld [vmem:[#allocation5 + $0x230] sm:$0xff]
    %v131 = vld [vmem:[#allocation5 + $0x238] sm:$0xff]
    %v132 = vld [vmem:[#allocation5 + $0x240] sm:$0xff]
    %v133 = vld [vmem:[#allocation5 + $0x248] sm:$0xff]
    %v134 = vld [vmem:[#allocation5 + $0x250] sm:$0xff]
    %v135 = vld [vmem:[#allocation5 + $0x258] sm:$0xff]
    %v136 = vld [vmem:[#allocation5 + $0x260] sm:$0xff]
    %v137 = vld [vmem:[#allocation5 + $0x268] sm:$0xff]
    %v138 = vld [vmem:[#allocation5 + $0x270] sm:$0xff]
    %v139 = vld [vmem:[#allocation5 + $0x278] sm:$0xff]
    %v140 = vld [vmem:[#allocation5 + $0x280] sm:$0xff]
    %v141 = vld [vmem:[#allocation5 + $0x288] sm:$0xff]
    %v142 = vld [vmem:[#allocation5 + $0x290] sm:$0xff]
    %v143 = vld [vmem:[#allocation5 + $0x298] sm:$0xff]
    %v144 = vld [vmem:[#allocation5 + $0x2a0] sm:$0xff]
    %v145 = vld [vmem:[#allocation5 + $0x2a8] sm:$0xff]
    %v146 = vld [vmem:[#allocation5 + $0x2b0] sm:$0xff]
    %v147 = vld [vmem:[#allocation5 + $0x2b8] sm:$0xff]
    %v148 = vld [vmem:[#allocation5 + $0x2c0] sm:$0xff]
    %v149 = vld [vmem:[#allocation5 + $0x2c8] sm:$0xff]
    %v150 = vld [vmem:[#allocation5 + $0x2d0] sm:$0xff]
    %v151 = vld [vmem:[#allocation5 + $0x2d8] sm:$0xff]
    %v152 = vld [vmem:[#allocation5 + $0x2e0] sm:$0xff]
    %v153 = vld [vmem:[#allocation5 + $0x2e8] sm:$0xff]
    %v154 = vld [vmem:[#allocation5 + $0x2f0] sm:$0xff]
    %v155 = vld [vmem:[#allocation5 + $0x2f8] sm:$0xff]
    %v156 = vld [vmem:[#allocation5 + $0x300] sm:$0xff]
    %v157 = vld [vmem:[#allocation5 + $0x308] sm:$0xff]
    %v158 = vld [vmem:[#allocation5 + $0x310] sm:$0xff]
    %v159 = vld [vmem:[#allocation5 + $0x318] sm:$0xff]
    %v160 = vld [vmem:[#allocation5 + $0x320] sm:$0xff]
    %v161 = vld [vmem:[#allocation5 + $0x328] sm:$0xff]
    %v162 = vld [vmem:[#allocation5 + $0x330] sm:$0xff]
    %v163 = vld [vmem:[#allocation5 + $0x338] sm:$0xff]
    %v164 = vld [vmem:[#allocation5 + $0x340] sm:$0xff]
    %v165 = vld [vmem:[#allocation5 + $0x348] sm:$0xff]
    %v166 = vld [vmem:[#allocation5 + $0x350] sm:$0xff]
    %v167 = vld [vmem:[#allocation5 + $0x358] sm:$0xff]
    %v168 = vld [vmem:[#allocation5 + $0x360] sm:$0xff]
    %v169 = vld [vmem:[#allocation5 + $0x368] sm:$0xff]
    %v170 = vld [vmem:[#allocation5 + $0x370] sm:$0xff]
    %v171 = vld [vmem:[#allocation5 + $0x378] sm:$0xff]
    %v172 = vld [vmem:[#allocation5 + $0x380] sm:$0xff]
    %v173 = vld [vmem:[#allocation5 + $0x388] sm:$0xff]
    %v174 = vld [vmem:[#allocation5 + $0x390] sm:$0xff]
    %v175 = vld [vmem:[#allocation5 + $0x398] sm:$0xff]
    %v176 = vld [vmem:[#allocation5 + $0x3a0] sm:$0xff]
    %v177 = vld [vmem:[#allocation5 + $0x3a8] sm:$0xff]
    %v178 = vld [vmem:[#allocation5 + $0x3b0] sm:$0xff]
    %v179 = vld [vmem:[#allocation5 + $0x3b8] sm:$0xff]
    %v180 = vld [vmem:[#allocation5 + $0x3c0] sm:$0xff]
    %v181 = vld [vmem:[#allocation5 + $0x3c8] sm:$0xff]
    %v182 = vld [vmem:[#allocation5 + $0x3d0] sm:$0xff]
    %v183 = vld [vmem:[#allocation5 + $0x3d8] sm:$0xff]
    %v184 = vld [vmem:[#allocation5 + $0x3e0] sm:$0xff]
    %v185 = vld [vmem:[#allocation5 + $0x3e8] sm:$0xff]
    %v186 = vld [vmem:[#allocation5 + $0x3f0] sm:$0xff]
    %v187 = vld [vmem:[#allocation5 + $0x3f8] sm:$0xff]
    %v188 = vld [vmem:[#allocation5 + $0x400] sm:$0xff]
    %v189 = vld [vmem:[#allocation5 + $0x408] sm:$0xff]
    %v190 = vld [vmem:[#allocation5 + $0x410] sm:$0xff]
    %v191 = vld [vmem:[#allocation5 + $0x418] sm:$0xff]
    %v192 = vld [vmem:[#allocation5 + $0x420] sm:$0xff]
    %v193 = vld [vmem:[#allocation5 + $0x428] sm:$0xff]
    %v194 = vld [vmem:[#allocation5 + $0x430] sm:$0xff]
    %v195 = vld [vmem:[#allocation5 + $0x438] sm:$0xff]
    %v196 = vld [vmem:[#allocation5 + $0x440] sm:$0xff]
    %v197 = vld [vmem:[#allocation5 + $0x448] sm:$0xff]
    %v198 = vld [vmem:[#allocation5 + $0x450] sm:$0xff]
    %v199 = vld [vmem:[#allocation5 + $0x458] sm:$0xff]
    %v200 = vld [vmem:[#allocation5 + $0x460] sm:$0xff]
    %v201 = vld [vmem:[#allocation5 + $0x468] sm:$0xff]
    %v202 = vld [vmem:[#allocation5 + $0x470] sm:$0xff]
    %v203 = vld [vmem:[#allocation5 + $0x478] sm:$0xff]
    %v204 = vld [vmem:[#allocation5 + $0x480] sm:$0xff]
    %v205 = vld [vmem:[#allocation5 + $0x488] sm:$0xff]
    %v206 = vld [vmem:[#allocation5 + $0x490] sm:$0xff]
    %v207 = vld [vmem:[#allocation5 + $0x498] sm:$0xff]
    %v208 = vld [vmem:[#allocation5 + $0x4a0] sm:$0xff]
    %v209 = vld [vmem:[#allocation5 + $0x4a8] sm:$0xff]
    %v210 = vld [vmem:[#allocation5 + $0x4b0] sm:$0xff]
    %v211 = vld [vmem:[#allocation5 + $0x4b8] sm:$0xff]
    %v212 = vld [vmem:[#allocation5 + $0x4c0] sm:$0xff]
    %v213 = vld [vmem:[#allocation5 + $0x4c8] sm:$0xff]
    %v214 = vld [vmem:[#allocation5 + $0x4d0] sm:$0xff]
    %v215 = vld [vmem:[#allocation5 + $0x4d8] sm:$0xff]
    %v216 = vld [vmem:[#allocation5 + $0x4e0] sm:$0xff]
    %v217 = vld [vmem:[#allocation5 + $0x4e8] sm:$0xff]
    %v218 = vld [vmem:[#allocation5 + $0x4f0] sm:$0xff]
    %v219 = vld [vmem:[#allocation5 + $0x4f8] sm:$0xff]
    %v220 = vld [vmem:[#allocation5 + $0x500] sm:$0xff]
    %v221 = vld [vmem:[#allocation5 + $0x508] sm:$0xff]
    %v222 = vld [vmem:[#allocation5 + $0x510] sm:$0xff]
    %v223 = vld [vmem:[#allocation5 + $0x518] sm:$0xff]
    %v224 = vld [vmem:[#allocation5 + $0x520] sm:$0xff]
    %v225 = vld [vmem:[#allocation5 + $0x528] sm:$0xff]
    %v226 = vld [vmem:[#allocation5 + $0x530] sm:$0xff]
    %v227 = vld [vmem:[#allocation5 + $0x538] sm:$0xff]
    %v228 = vld [vmem:[#allocation5 + $0x540] sm:$0xff]
    %v229 = vld [vmem:[#allocation5 + $0x548] sm:$0xff]
    %v230 = vld [vmem:[#allocation5 + $0x550] sm:$0xff]
    %v231 = vld [vmem:[#allocation5 + $0x558] sm:$0xff]
    %v232 = vld [vmem:[#allocation5 + $0x560] sm:$0xff]
    %v233 = vld [vmem:[#allocation5 + $0x568] sm:$0xff]
    %v234 = vld [vmem:[#allocation5 + $0x570] sm:$0xff]
    %v235 = vld [vmem:[#allocation5 + $0x578] sm:$0xff]
    %v236 = vld [vmem:[#allocation5 + $0x580] sm:$0xff]
    %v237 = vld [vmem:[#allocation5 + $0x588] sm:$0xff]
    %v238 = vld [vmem:[#allocation5 + $0x590] sm:$0xff]
    %v239 = vld [vmem:[#allocation5 + $0x598] sm:$0xff]
    %v240 = vld [vmem:[#allocation5 + $0x5a0] sm:$0xff]
    %v241 = vld [vmem:[#allocation5 + $0x5a8] sm:$0xff]
    %v242 = vld [vmem:[#allocation5 + $0x5b0] sm:$0xff]
    %v243 = vld [vmem:[#allocation5 + $0x5b8] sm:$0xff]
    %v244 = vld [vmem:[#allocation5 + $0x5c0] sm:$0xff]
    %v245 = vld [vmem:[#allocation5 + $0x5c8] sm:$0xff]
    %v246 = vld [vmem:[#allocation5 + $0x5d0] sm:$0xff]
    %v247 = vld [vmem:[#allocation5 + $0x5d8] sm:$0xff]
    %v248 = vld [vmem:[#allocation5 + $0x5e0] sm:$0xff]
    %v249 = vld [vmem:[#allocation5 + $0x5e8] sm:$0xff]
    %v250 = vld [vmem:[#allocation5 + $0x5f0] sm:$0xff]
    %v251 = vld [vmem:[#allocation5 + $0x5f8] sm:$0xff]
    %v252 = vld [vmem:[#allocation5 + $0x600] sm:$0xff]
    %v253 = vld [vmem:[#allocation5 + $0x608] sm:$0xff]
    %v254 = vld [vmem:[#allocation5 + $0x610] sm:$0xff]
    %v255 = vld [vmem:[#allocation5 + $0x618] sm:$0xff]
    %v256 = vld [vmem:[#allocation5 + $0x620] sm:$0xff]
    %v257 = vld [vmem:[#allocation5 + $0x628] sm:$0xff]
    %v258 = vld [vmem:[#allocation5 + $0x630] sm:$0xff]
    %v259 = vld [vmem:[#allocation5 + $0x638] sm:$0xff]
    %v260 = vld [vmem:[#allocation5 + $0x640] sm:$0xff]
    %v261 = vld [vmem:[#allocation5 + $0x648] sm:$0xff]
    %v262 = vld [vmem:[#allocation5 + $0x650] sm:$0xff]
    %v263 = vld [vmem:[#allocation5 + $0x658] sm:$0xff]
    %v264 = vld [vmem:[#allocation5 + $0x660] sm:$0xff]
    %v265 = vld [vmem:[#allocation5 + $0x668] sm:$0xff]
    %v266 = vld [vmem:[#allocation5 + $0x670] sm:$0xff]
    %v267 = vld [vmem:[#allocation5 + $0x678] sm:$0xff]
    %v268 = vld [vmem:[#allocation5 + $0x680] sm:$0xff]
    %v269 = vld [vmem:[#allocation5 + $0x688] sm:$0xff]
    %v270 = vld [vmem:[#allocation5 + $0x690] sm:$0xff]
    %v271 = vld [vmem:[#allocation5 + $0x698] sm:$0xff]
    %v272 = vld [vmem:[#allocation5 + $0x6a0] sm:$0xff]
    %v273 = vld [vmem:[#allocation5 + $0x6a8] sm:$0xff]
    %v274 = vld [vmem:[#allocation5 + $0x6b0] sm:$0xff]
    %v275 = vld [vmem:[#allocation5 + $0x6b8] sm:$0xff]
    %v276 = vld [vmem:[#allocation5 + $0x6c0] sm:$0xff]
    %v277 = vld [vmem:[#allocation5 + $0x6c8] sm:$0xff]
    %v278 = vld [vmem:[#allocation5 + $0x6d0] sm:$0xff]
    %v279 = vld [vmem:[#allocation5 + $0x6d8] sm:$0xff]
    %v280 = vld [vmem:[#allocation5 + $0x6e0] sm:$0xff]
    %v281 = vld [vmem:[#allocation5 + $0x6e8] sm:$0xff]
    %v282 = vld [vmem:[#allocation5 + $0x6f0] sm:$0xff]
    %v283 = vld [vmem:[#allocation5 + $0x6f8] sm:$0xff]
    %v284 = vld [vmem:[#allocation5 + $0x700] sm:$0xff]
    %v285 = vld [vmem:[#allocation5 + $0x708] sm:$0xff]
    %v286 = vld [vmem:[#allocation5 + $0x710] sm:$0xff]
    %v287 = vld [vmem:[#allocation5 + $0x718] sm:$0xff]
    %v288 = vld [vmem:[#allocation5 + $0x720] sm:$0xff]
    %v289 = vld [vmem:[#allocation5 + $0x728] sm:$0xff]
    %v290 = vld [vmem:[#allocation5 + $0x730] sm:$0xff]
    %v291 = vld [vmem:[#allocation5 + $0x738] sm:$0xff]
    %v292 = vld [vmem:[#allocation5 + $0x740] sm:$0xff]
    %v293 = vld [vmem:[#allocation5 + $0x748] sm:$0xff]
    %v294 = vld [vmem:[#allocation5 + $0x750] sm:$0xff]
    %v295 = vld [vmem:[#allocation5 + $0x758] sm:$0xff]
    %v296 = vld [vmem:[#allocation5 + $0x760] sm:$0xff]
    %v297 = vld [vmem:[#allocation5 + $0x768] sm:$0xff]
    %v298 = vld [vmem:[#allocation5 + $0x770] sm:$0xff]
    %v299 = vld [vmem:[#allocation5 + $0x778] sm:$0xff]
    %v300 = vld [vmem:[#allocation5 + $0x780] sm:$0xff]
    %v301 = vld [vmem:[#allocation5 + $0x788] sm:$0xff]
    %v302 = vld [vmem:[#allocation5 + $0x790] sm:$0xff]
    %v303 = vld [vmem:[#allocation5 + $0x798] sm:$0xff]
    %v304 = vld [vmem:[#allocation5 + $0x7a0] sm:$0xff]
    %v305 = vld [vmem:[#allocation5 + $0x7a8] sm:$0xff]
    %v306 = vld [vmem:[#allocation5 + $0x7b0] sm:$0xff]
    %v307 = vld [vmem:[#allocation5 + $0x7b8] sm:$0xff]
    %v308 = vld [vmem:[#allocation5 + $0x7c0] sm:$0xff]
    %v309 = vld [vmem:[#allocation5 + $0x7c8] sm:$0xff]
    %v310 = vld [vmem:[#allocation5 + $0x7d0] sm:$0xff]
    %v311 = vld [vmem:[#allocation5 + $0x7d8] sm:$0xff]
    %v312 = vld [vmem:[#allocation5 + $0x7e0] sm:$0xff]
    %v313 = vld [vmem:[#allocation5 + $0x7e8] sm:$0xff]
    %v314 = vld [vmem:[#allocation5 + $0x7f0] sm:$0xff]
    %v315 = vld [vmem:[#allocation5 + $0x7f8] sm:$0xff]
    %v316 = vld [vmem:[#allocation7] sm:$0xff]
    %v318 = vlaneseq
    %v319 = vshrl.u32 %v318, 7
    %v320 = vsub.s32 0, %v319
    %v321 = vrot.slane %v316, %v320
    %v322 = vlaneseq
    %v323 = vshrl.u32 %v322, 7
    %v324 = vsub.s32 1, %v323
    %v325 = vrot.slane %v316, %v324
    %v326 = vlaneseq
    %v327 = vshrl.u32 %v326, 7
    %v328 = vsub.s32 2, %v327
    %v329 = vrot.slane %v316, %v328
    %v330 = vlaneseq
    %v331 = vshrl.u32 %v330, 7
    %v332 = vsub.s32 3, %v331
    %v333 = vrot.slane %v316, %v332
    %v334 = vlaneseq
    %v335 = vshrl.u32 %v334, 7
    %v336 = vsub.s32 4, %v335
    %v337 = vrot.slane %v316, %v336
    %v338 = vlaneseq
    %v339 = vshrl.u32 %v338, 7
    %v340 = vsub.s32 5, %v339
    %v341 = vrot.slane %v316, %v340
    %v342 = vlaneseq
    %v343 = vshrl.u32 %v342, 7
    %v344 = vsub.s32 6, %v343
    %v345 = vrot.slane %v316, %v344
    %v346 = vlaneseq
    %v347 = vshrl.u32 %v346, 7
    %v348 = vsub.s32 7, %v347
    %v349 = vrot.slane %v316, %v348
    %v614 = vunpack.c.l.b16 %v60
    %v615 = vunpack.c.h.b16 %v60
    %v616 = vunpack.c.l.b16 %v61
    %v617 = vunpack.c.h.b16 %v61
    %v618 = vunpack.c.l.b16 %v62
    %v619 = vunpack.c.h.b16 %v62
    %v620 = vunpack.c.l.b16 %v63
    %v621 = vunpack.c.h.b16 %v63
    %v622 = vunpack.c.l.b16 %v64
    %v623 = vunpack.c.h.b16 %v64
    %v624 = vunpack.c.l.b16 %v65
    %v625 = vunpack.c.h.b16 %v65
    %v626 = vunpack.c.l.b16 %v66
    %v627 = vunpack.c.h.b16 %v66
    %v628 = vunpack.c.l.b16 %v67
    %v629 = vunpack.c.h.b16 %v67
    %v630 = vunpack.c.l.b16 %v68
    %v631 = vunpack.c.h.b16 %v68
    %v632 = vunpack.c.l.b16 %v69
    %v633 = vunpack.c.h.b16 %v69
    %v634 = vunpack.c.l.b16 %v70
    %v635 = vunpack.c.h.b16 %v70
    %v636 = vunpack.c.l.b16 %v71
    %v637 = vunpack.c.h.b16 %v71
    %v638 = vunpack.c.l.b16 %v72
    %v639 = vunpack.c.h.b16 %v72
    %v640 = vunpack.c.l.b16 %v73
    %v641 = vunpack.c.h.b16 %v73
    %v642 = vunpack.c.l.b16 %v74
    %v643 = vunpack.c.h.b16 %v74
    %v644 = vunpack.c.l.b16 %v75
    %v645 = vunpack.c.h.b16 %v75
    %v646 = vunpack.c.l.b16 %v76
    %v647 = vunpack.c.h.b16 %v76
    %v648 = vunpack.c.l.b16 %v77
    %v649 = vunpack.c.h.b16 %v77
    %v650 = vunpack.c.l.b16 %v78
    %v651 = vunpack.c.h.b16 %v78
    %v652 = vunpack.c.l.b16 %v79
    %v653 = vunpack.c.h.b16 %v79
    %v654 = vunpack.c.l.b16 %v80
    %v655 = vunpack.c.h.b16 %v80
    %v656 = vunpack.c.l.b16 %v81
    %v657 = vunpack.c.h.b16 %v81
    %v658 = vunpack.c.l.b16 %v82
    %v659 = vunpack.c.h.b16 %v82
    %v660 = vunpack.c.l.b16 %v83
    %v661 = vunpack.c.h.b16 %v83
    %v662 = vunpack.c.l.b16 %v84
    %v663 = vunpack.c.h.b16 %v84
    %v664 = vunpack.c.l.b16 %v85
    %v665 = vunpack.c.h.b16 %v85
    %v666 = vunpack.c.l.b16 %v86
    %v667 = vunpack.c.h.b16 %v86
    %v668 = vunpack.c.l.b16 %v87
    %v669 = vunpack.c.h.b16 %v87
    %v670 = vunpack.c.l.b16 %v88
    %v671 = vunpack.c.h.b16 %v88
    %v672 = vunpack.c.l.b16 %v89
    %v673 = vunpack.c.h.b16 %v89
    %v674 = vunpack.c.l.b16 %v90
    %v675 = vunpack.c.h.b16 %v90
    %v676 = vunpack.c.l.b16 %v91
    %v677 = vunpack.c.h.b16 %v91
    %v678 = vunpack.c.l.b16 %v92
    %v679 = vunpack.c.h.b16 %v92
    %v680 = vunpack.c.l.b16 %v93
    %v681 = vunpack.c.h.b16 %v93
    %v682 = vunpack.c.l.b16 %v94
    %v683 = vunpack.c.h.b16 %v94
    %v684 = vunpack.c.l.b16 %v95
    %v685 = vunpack.c.h.b16 %v95
    %v686 = vunpack.c.l.b16 %v96
    %v687 = vunpack.c.h.b16 %v96
    %v688 = vunpack.c.l.b16 %v97
    %v689 = vunpack.c.h.b16 %v97
    %v690 = vunpack.c.l.b16 %v98
    %v691 = vunpack.c.h.b16 %v98
    %v692 = vunpack.c.l.b16 %v99
    %v693 = vunpack.c.h.b16 %v99
    %v694 = vunpack.c.l.b16 %v100
    %v695 = vunpack.c.h.b16 %v100
    %v696 = vunpack.c.l.b16 %v101
    %v697 = vunpack.c.h.b16 %v101
    %v698 = vunpack.c.l.b16 %v102
    %v699 = vunpack.c.h.b16 %v102
    %v700 = vunpack.c.l.b16 %v103
    %v701 = vunpack.c.h.b16 %v103
    %v702 = vunpack.c.l.b16 %v104
    %v703 = vunpack.c.h.b16 %v104
    %v704 = vunpack.c.l.b16 %v105
    %v705 = vunpack.c.h.b16 %v105
    %v706 = vunpack.c.l.b16 %v106
    %v707 = vunpack.c.h.b16 %v106
    %v708 = vunpack.c.l.b16 %v107
    %v709 = vunpack.c.h.b16 %v107
    %v710 = vunpack.c.l.b16 %v108
    %v711 = vunpack.c.h.b16 %v108
    %v712 = vunpack.c.l.b16 %v109
    %v713 = vunpack.c.h.b16 %v109
    %v714 = vunpack.c.l.b16 %v110
    %v715 = vunpack.c.h.b16 %v110
    %v716 = vunpack.c.l.b16 %v111
    %v717 = vunpack.c.h.b16 %v111
    %v718 = vunpack.c.l.b16 %v112
    %v719 = vunpack.c.h.b16 %v112
    %v720 = vunpack.c.l.b16 %v113
    %v721 = vunpack.c.h.b16 %v113
    %v722 = vunpack.c.l.b16 %v114
    %v723 = vunpack.c.h.b16 %v114
    %v724 = vunpack.c.l.b16 %v115
    %v725 = vunpack.c.h.b16 %v115
    %v726 = vunpack.c.l.b16 %v116
    %v727 = vunpack.c.h.b16 %v116
    %v728 = vunpack.c.l.b16 %v117
    %v729 = vunpack.c.h.b16 %v117
    %v730 = vunpack.c.l.b16 %v118
    %v731 = vunpack.c.h.b16 %v118
    %v732 = vunpack.c.l.b16 %v119
    %v733 = vunpack.c.h.b16 %v119
    %v734 = vunpack.c.l.b16 %v120
    %v735 = vunpack.c.h.b16 %v120
    %v736 = vunpack.c.l.b16 %v121
    %v737 = vunpack.c.h.b16 %v121
    %v738 = vunpack.c.l.b16 %v122
    %v739 = vunpack.c.h.b16 %v122
    %v740 = vunpack.c.l.b16 %v123
    %v741 = vunpack.c.h.b16 %v123
    %v742 = vunpack.c.l.b16 %v124
    %v743 = vunpack.c.h.b16 %v124
    %v744 = vunpack.c.l.b16 %v125
    %v745 = vunpack.c.h.b16 %v125
    %v746 = vunpack.c.l.b16 %v126
    %v747 = vunpack.c.h.b16 %v126
    %v748 = vunpack.c.l.b16 %v127
    %v749 = vunpack.c.h.b16 %v127
    %v750 = vunpack.c.l.b16 %v128
    %v751 = vunpack.c.h.b16 %v128
    %v752 = vunpack.c.l.b16 %v129
    %v753 = vunpack.c.h.b16 %v129
    %v754 = vunpack.c.l.b16 %v130
    %v755 = vunpack.c.h.b16 %v130
    %v756 = vunpack.c.l.b16 %v131
    %v757 = vunpack.c.h.b16 %v131
    %v758 = vunpack.c.l.b16 %v132
    %v759 = vunpack.c.h.b16 %v132
    %v760 = vunpack.c.l.b16 %v133
    %v761 = vunpack.c.h.b16 %v133
    %v762 = vunpack.c.l.b16 %v134
    %v763 = vunpack.c.h.b16 %v134
    %v764 = vunpack.c.l.b16 %v135
    %v765 = vunpack.c.h.b16 %v135
    %v766 = vunpack.c.l.b16 %v136
    %v767 = vunpack.c.h.b16 %v136
    %v768 = vunpack.c.l.b16 %v137
    %v769 = vunpack.c.h.b16 %v137
    %v770 = vunpack.c.l.b16 %v138
    %v771 = vunpack.c.h.b16 %v138
    %v772 = vunpack.c.l.b16 %v139
    %v773 = vunpack.c.h.b16 %v139
    %v774 = vunpack.c.l.b16 %v140
    %v775 = vunpack.c.h.b16 %v140
    %v776 = vunpack.c.l.b16 %v141
    %v777 = vunpack.c.h.b16 %v141
    %v778 = vunpack.c.l.b16 %v142
    %v779 = vunpack.c.h.b16 %v142
    %v780 = vunpack.c.l.b16 %v143
    %v781 = vunpack.c.h.b16 %v143
    %v782 = vunpack.c.l.b16 %v144
    %v783 = vunpack.c.h.b16 %v144
    %v784 = vunpack.c.l.b16 %v145
    %v785 = vunpack.c.h.b16 %v145
    %v786 = vunpack.c.l.b16 %v146
    %v787 = vunpack.c.h.b16 %v146
    %v788 = vunpack.c.l.b16 %v147
    %v789 = vunpack.c.h.b16 %v147
    %v790 = vunpack.c.l.b16 %v148
    %v791 = vunpack.c.h.b16 %v148
    %v792 = vunpack.c.l.b16 %v149
    %v793 = vunpack.c.h.b16 %v149
    %v794 = vunpack.c.l.b16 %v150
    %v795 = vunpack.c.h.b16 %v150
    %v796 = vunpack.c.l.b16 %v151
    %v797 = vunpack.c.h.b16 %v151
    %v798 = vunpack.c.l.b16 %v152
    %v799 = vunpack.c.h.b16 %v152
    %v800 = vunpack.c.l.b16 %v153
    %v801 = vunpack.c.h.b16 %v153
    %v802 = vunpack.c.l.b16 %v154
    %v803 = vunpack.c.h.b16 %v154
    %v804 = vunpack.c.l.b16 %v155
    %v805 = vunpack.c.h.b16 %v155
    %v806 = vunpack.c.l.b16 %v156
    %v807 = vunpack.c.h.b16 %v156
    %v808 = vunpack.c.l.b16 %v157
    %v809 = vunpack.c.h.b16 %v157
    %v810 = vunpack.c.l.b16 %v158
    %v811 = vunpack.c.h.b16 %v158
    %v812 = vunpack.c.l.b16 %v159
    %v813 = vunpack.c.h.b16 %v159
    %v814 = vunpack.c.l.b16 %v160
    %v815 = vunpack.c.h.b16 %v160
    %v816 = vunpack.c.l.b16 %v161
    %v817 = vunpack.c.h.b16 %v161
    %v818 = vunpack.c.l.b16 %v162
    %v819 = vunpack.c.h.b16 %v162
    %v820 = vunpack.c.l.b16 %v163
    %v821 = vunpack.c.h.b16 %v163
    %v822 = vunpack.c.l.b16 %v164
    %v823 = vunpack.c.h.b16 %v164
    %v824 = vunpack.c.l.b16 %v165
    %v825 = vunpack.c.h.b16 %v165
    %v826 = vunpack.c.l.b16 %v166
    %v827 = vunpack.c.h.b16 %v166
    %v828 = vunpack.c.l.b16 %v167
    %v829 = vunpack.c.h.b16 %v167
    %v830 = vunpack.c.l.b16 %v168
    %v831 = vunpack.c.h.b16 %v168
    %v832 = vunpack.c.l.b16 %v169
    %v833 = vunpack.c.h.b16 %v169
    %v834 = vunpack.c.l.b16 %v170
    %v835 = vunpack.c.h.b16 %v170
    %v836 = vunpack.c.l.b16 %v171
    %v837 = vunpack.c.h.b16 %v171
    %v838 = vunpack.c.l.b16 %v172
    %v839 = vunpack.c.h.b16 %v172
    %v840 = vunpack.c.l.b16 %v173
    %v841 = vunpack.c.h.b16 %v173
    %v842 = vunpack.c.l.b16 %v174
    %v843 = vunpack.c.h.b16 %v174
    %v844 = vunpack.c.l.b16 %v175
    %v845 = vunpack.c.h.b16 %v175
    %v846 = vunpack.c.l.b16 %v176
    %v847 = vunpack.c.h.b16 %v176
    %v848 = vunpack.c.l.b16 %v177
    %v849 = vunpack.c.h.b16 %v177
    %v850 = vunpack.c.l.b16 %v178
    %v851 = vunpack.c.h.b16 %v178
    %v852 = vunpack.c.l.b16 %v179
    %v853 = vunpack.c.h.b16 %v179
    %v854 = vunpack.c.l.b16 %v180
    %v855 = vunpack.c.h.b16 %v180
    %v856 = vunpack.c.l.b16 %v181
    %v857 = vunpack.c.h.b16 %v181
    %v858 = vunpack.c.l.b16 %v182
    %v859 = vunpack.c.h.b16 %v182
    %v860 = vunpack.c.l.b16 %v183
    %v861 = vunpack.c.h.b16 %v183
    %v862 = vunpack.c.l.b16 %v184
    %v863 = vunpack.c.h.b16 %v184
    %v864 = vunpack.c.l.b16 %v185
    %v865 = vunpack.c.h.b16 %v185
    %v866 = vunpack.c.l.b16 %v186
    %v867 = vunpack.c.h.b16 %v186
    %v868 = vunpack.c.l.b16 %v187
    %v869 = vunpack.c.h.b16 %v187
    %v870 = vunpack.c.l.b16 %v188
    %v871 = vunpack.c.h.b16 %v188
    %v872 = vunpack.c.l.b16 %v189
    %v873 = vunpack.c.h.b16 %v189
    %v874 = vunpack.c.l.b16 %v190
    %v875 = vunpack.c.h.b16 %v190
    %v876 = vunpack.c.l.b16 %v191
    %v877 = vunpack.c.h.b16 %v191
    %v878 = vunpack.c.l.b16 %v192
    %v879 = vunpack.c.h.b16 %v192
    %v880 = vunpack.c.l.b16 %v193
    %v881 = vunpack.c.h.b16 %v193
    %v882 = vunpack.c.l.b16 %v194
    %v883 = vunpack.c.h.b16 %v194
    %v884 = vunpack.c.l.b16 %v195
    %v885 = vunpack.c.h.b16 %v195
    %v886 = vunpack.c.l.b16 %v196
    %v887 = vunpack.c.h.b16 %v196
    %v888 = vunpack.c.l.b16 %v197
    %v889 = vunpack.c.h.b16 %v197
    %v890 = vunpack.c.l.b16 %v198
    %v891 = vunpack.c.h.b16 %v198
    %v892 = vunpack.c.l.b16 %v199
    %v893 = vunpack.c.h.b16 %v199
    %v894 = vunpack.c.l.b16 %v200
    %v895 = vunpack.c.h.b16 %v200
    %v896 = vunpack.c.l.b16 %v201
    %v897 = vunpack.c.h.b16 %v201
    %v898 = vunpack.c.l.b16 %v202
    %v899 = vunpack.c.h.b16 %v202
    %v900 = vunpack.c.l.b16 %v203
    %v901 = vunpack.c.h.b16 %v203
    %v902 = vunpack.c.l.b16 %v204
    %v903 = vunpack.c.h.b16 %v204
    %v904 = vunpack.c.l.b16 %v205
    %v905 = vunpack.c.h.b16 %v205
    %v906 = vunpack.c.l.b16 %v206
    %v907 = vunpack.c.h.b16 %v206
    %v908 = vunpack.c.l.b16 %v207
    %v909 = vunpack.c.h.b16 %v207
    %v910 = vunpack.c.l.b16 %v208
    %v911 = vunpack.c.h.b16 %v208
    %v912 = vunpack.c.l.b16 %v209
    %v913 = vunpack.c.h.b16 %v209
    %v914 = vunpack.c.l.b16 %v210
    %v915 = vunpack.c.h.b16 %v210
    %v916 = vunpack.c.l.b16 %v211
    %v917 = vunpack.c.h.b16 %v211
    %v918 = vunpack.c.l.b16 %v212
    %v919 = vunpack.c.h.b16 %v212
    %v920 = vunpack.c.l.b16 %v213
    %v921 = vunpack.c.h.b16 %v213
    %v922 = vunpack.c.l.b16 %v214
    %v923 = vunpack.c.h.b16 %v214
    %v924 = vunpack.c.l.b16 %v215
    %v925 = vunpack.c.h.b16 %v215
    %v926 = vunpack.c.l.b16 %v216
    %v927 = vunpack.c.h.b16 %v216
    %v928 = vunpack.c.l.b16 %v217
    %v929 = vunpack.c.h.b16 %v217
    %v930 = vunpack.c.l.b16 %v218
    %v931 = vunpack.c.h.b16 %v218
    %v932 = vunpack.c.l.b16 %v219
    %v933 = vunpack.c.h.b16 %v219
    %v934 = vunpack.c.l.b16 %v220
    %v935 = vunpack.c.h.b16 %v220
    %v936 = vunpack.c.l.b16 %v221
    %v937 = vunpack.c.h.b16 %v221
    %v938 = vunpack.c.l.b16 %v222
    %v939 = vunpack.c.h.b16 %v222
    %v940 = vunpack.c.l.b16 %v223
    %v941 = vunpack.c.h.b16 %v223
    %v942 = vunpack.c.l.b16 %v224
    %v943 = vunpack.c.h.b16 %v224
    %v944 = vunpack.c.l.b16 %v225
    %v945 = vunpack.c.h.b16 %v225
    %v946 = vunpack.c.l.b16 %v226
    %v947 = vunpack.c.h.b16 %v226
    %v948 = vunpack.c.l.b16 %v227
    %v949 = vunpack.c.h.b16 %v227
    %v950 = vunpack.c.l.b16 %v228
    %v951 = vunpack.c.h.b16 %v228
    %v952 = vunpack.c.l.b16 %v229
    %v953 = vunpack.c.h.b16 %v229
    %v954 = vunpack.c.l.b16 %v230
    %v955 = vunpack.c.h.b16 %v230
    %v956 = vunpack.c.l.b16 %v231
    %v957 = vunpack.c.h.b16 %v231
    %v958 = vunpack.c.l.b16 %v232
    %v959 = vunpack.c.h.b16 %v232
    %v960 = vunpack.c.l.b16 %v233
    %v961 = vunpack.c.h.b16 %v233
    %v962 = vunpack.c.l.b16 %v234
    %v963 = vunpack.c.h.b16 %v234
    %v964 = vunpack.c.l.b16 %v235
    %v965 = vunpack.c.h.b16 %v235
    %v966 = vunpack.c.l.b16 %v236
    %v967 = vunpack.c.h.b16 %v236
    %v968 = vunpack.c.l.b16 %v237
    %v969 = vunpack.c.h.b16 %v237
    %v970 = vunpack.c.l.b16 %v238
    %v971 = vunpack.c.h.b16 %v238
    %v972 = vunpack.c.l.b16 %v239
    %v973 = vunpack.c.h.b16 %v239
    %v974 = vunpack.c.l.b16 %v240
    %v975 = vunpack.c.h.b16 %v240
    %v976 = vunpack.c.l.b16 %v241
    %v977 = vunpack.c.h.b16 %v241
    %v978 = vunpack.c.l.b16 %v242
    %v979 = vunpack.c.h.b16 %v242
    %v980 = vunpack.c.l.b16 %v243
    %v981 = vunpack.c.h.b16 %v243
    %v982 = vunpack.c.l.b16 %v244
    %v983 = vunpack.c.h.b16 %v244
    %v984 = vunpack.c.l.b16 %v245
    %v985 = vunpack.c.h.b16 %v245
    %v986 = vunpack.c.l.b16 %v246
    %v987 = vunpack.c.h.b16 %v246
    %v988 = vunpack.c.l.b16 %v247
    %v989 = vunpack.c.h.b16 %v247
    %v990 = vunpack.c.l.b16 %v248
    %v991 = vunpack.c.h.b16 %v248
    %v992 = vunpack.c.l.b16 %v249
    %v993 = vunpack.c.h.b16 %v249
    %v994 = vunpack.c.l.b16 %v250
    %v995 = vunpack.c.h.b16 %v250
    %v996 = vunpack.c.l.b16 %v251
    %v997 = vunpack.c.h.b16 %v251
    %v998 = vunpack.c.l.b16 %v252
    %v999 = vunpack.c.h.b16 %v252
    %v1000 = vunpack.c.l.b16 %v253
    %v1001 = vunpack.c.h.b16 %v253
    %v1002 = vunpack.c.l.b16 %v254
    %v1003 = vunpack.c.h.b16 %v254
    %v1004 = vunpack.c.l.b16 %v255
    %v1005 = vunpack.c.h.b16 %v255
    %v1006 = vunpack.c.l.b16 %v256
    %v1007 = vunpack.c.h.b16 %v256
    %v1008 = vunpack.c.l.b16 %v257
    %v1009 = vunpack.c.h.b16 %v257
    %v1010 = vunpack.c.l.b16 %v258
    %v1011 = vunpack.c.h.b16 %v258
    %v1012 = vunpack.c.l.b16 %v259
    %v1013 = vunpack.c.h.b16 %v259
    %v1014 = vunpack.c.l.b16 %v260
    %v1015 = vunpack.c.h.b16 %v260
    %v1016 = vunpack.c.l.b16 %v261
    %v1017 = vunpack.c.h.b16 %v261
    %v1018 = vunpack.c.l.b16 %v262
    %v1019 = vunpack.c.h.b16 %v262
    %v1020 = vunpack.c.l.b16 %v263
    %v1021 = vunpack.c.h.b16 %v263
    %v1022 = vunpack.c.l.b16 %v264
    %v1023 = vunpack.c.h.b16 %v264
    %v1024 = vunpack.c.l.b16 %v265
    %v1025 = vunpack.c.h.b16 %v265
    %v1026 = vunpack.c.l.b16 %v266
    %v1027 = vunpack.c.h.b16 %v266
    %v1028 = vunpack.c.l.b16 %v267
    %v1029 = vunpack.c.h.b16 %v267
    %v1030 = vunpack.c.l.b16 %v268
    %v1031 = vunpack.c.h.b16 %v268
    %v1032 = vunpack.c.l.b16 %v269
    %v1033 = vunpack.c.h.b16 %v269
    %v1034 = vunpack.c.l.b16 %v270
    %v1035 = vunpack.c.h.b16 %v270
    %v1036 = vunpack.c.l.b16 %v271
    %v1037 = vunpack.c.h.b16 %v271
    %v1038 = vunpack.c.l.b16 %v272
    %v1039 = vunpack.c.h.b16 %v272
    %v1040 = vunpack.c.l.b16 %v273
    %v1041 = vunpack.c.h.b16 %v273
    %v1042 = vunpack.c.l.b16 %v274
    %v1043 = vunpack.c.h.b16 %v274
    %v1044 = vunpack.c.l.b16 %v275
    %v1045 = vunpack.c.h.b16 %v275
    %v1046 = vunpack.c.l.b16 %v276
    %v1047 = vunpack.c.h.b16 %v276
    %v1048 = vunpack.c.l.b16 %v277
    %v1049 = vunpack.c.h.b16 %v277
    %v1050 = vunpack.c.l.b16 %v278
    %v1051 = vunpack.c.h.b16 %v278
    %v1052 = vunpack.c.l.b16 %v279
    %v1053 = vunpack.c.h.b16 %v279
    %v1054 = vunpack.c.l.b16 %v280
    %v1055 = vunpack.c.h.b16 %v280
    %v1056 = vunpack.c.l.b16 %v281
    %v1057 = vunpack.c.h.b16 %v281
    %v1058 = vunpack.c.l.b16 %v282
    %v1059 = vunpack.c.h.b16 %v282
    %v1060 = vunpack.c.l.b16 %v283
    %v1061 = vunpack.c.h.b16 %v283
    %v1062 = vunpack.c.l.b16 %v284
    %v1063 = vunpack.c.h.b16 %v284
    %v1064 = vunpack.c.l.b16 %v285
    %v1065 = vunpack.c.h.b16 %v285
    %v1066 = vunpack.c.l.b16 %v286
    %v1067 = vunpack.c.h.b16 %v286
    %v1068 = vunpack.c.l.b16 %v287
    %v1069 = vunpack.c.h.b16 %v287
    %v1070 = vunpack.c.l.b16 %v288
    %v1071 = vunpack.c.h.b16 %v288
    %v1072 = vunpack.c.l.b16 %v289
    %v1073 = vunpack.c.h.b16 %v289
    %v1074 = vunpack.c.l.b16 %v290
    %v1075 = vunpack.c.h.b16 %v290
    %v1076 = vunpack.c.l.b16 %v291
    %v1077 = vunpack.c.h.b16 %v291
    %v1078 = vunpack.c.l.b16 %v292
    %v1079 = vunpack.c.h.b16 %v292
    %v1080 = vunpack.c.l.b16 %v293
    %v1081 = vunpack.c.h.b16 %v293
    %v1082 = vunpack.c.l.b16 %v294
    %v1083 = vunpack.c.h.b16 %v294
    %v1084 = vunpack.c.l.b16 %v295
    %v1085 = vunpack.c.h.b16 %v295
    %v1086 = vunpack.c.l.b16 %v296
    %v1087 = vunpack.c.h.b16 %v296
    %v1088 = vunpack.c.l.b16 %v297
    %v1089 = vunpack.c.h.b16 %v297
    %v1090 = vunpack.c.l.b16 %v298
    %v1091 = vunpack.c.h.b16 %v298
    %v1092 = vunpack.c.l.b16 %v299
    %v1093 = vunpack.c.h.b16 %v299
    %v1094 = vunpack.c.l.b16 %v300
    %v1095 = vunpack.c.h.b16 %v300
    %v1096 = vunpack.c.l.b16 %v301
    %v1097 = vunpack.c.h.b16 %v301
    %v1098 = vunpack.c.l.b16 %v302
    %v1099 = vunpack.c.h.b16 %v302
    %v1100 = vunpack.c.l.b16 %v303
    %v1101 = vunpack.c.h.b16 %v303
    %v1102 = vunpack.c.l.b16 %v304
    %v1103 = vunpack.c.h.b16 %v304
    %v1104 = vunpack.c.l.b16 %v305
    %v1105 = vunpack.c.h.b16 %v305
    %v1106 = vunpack.c.l.b16 %v306
    %v1107 = vunpack.c.h.b16 %v306
    %v1108 = vunpack.c.l.b16 %v307
    %v1109 = vunpack.c.h.b16 %v307
    %v1110 = vunpack.c.l.b16 %v308
    %v1111 = vunpack.c.h.b16 %v308
    %v1112 = vunpack.c.l.b16 %v309
    %v1113 = vunpack.c.h.b16 %v309
    %v1114 = vunpack.c.l.b16 %v310
    %v1115 = vunpack.c.h.b16 %v310
    %v1116 = vunpack.c.l.b16 %v311
    %v1117 = vunpack.c.h.b16 %v311
    %v1118 = vunpack.c.l.b16 %v312
    %v1119 = vunpack.c.h.b16 %v312
    %v1120 = vunpack.c.l.b16 %v313
    %v1121 = vunpack.c.h.b16 %v313
    %v1122 = vunpack.c.l.b16 %v314
    %v1123 = vunpack.c.h.b16 %v314
    %v1124 = vunpack.c.l.b16 %v315
    %v1125 = vunpack.c.h.b16 %v315
    %v1126 = vpack.c.b16 %v622, %v614
    %v1127 = vpack.c.b16 %v623, %v615
    %v1128 = vpack.c.b16 %v624, %v616
    %v1129 = vpack.c.b16 %v625, %v617
    %v1130 = vpack.c.b16 %v626, %v618
    %v1131 = vpack.c.b16 %v627, %v619
    %v1132 = vpack.c.b16 %v628, %v620
    %v1133 = vpack.c.b16 %v629, %v621
    %v1134 = vpack.c.b16 %v638, %v630
    %v1135 = vpack.c.b16 %v639, %v631
    %v1136 = vpack.c.b16 %v640, %v632
    %v1137 = vpack.c.b16 %v641, %v633
    %v1138 = vpack.c.b16 %v642, %v634
    %v1139 = vpack.c.b16 %v643, %v635
    %v1140 = vpack.c.b16 %v644, %v636
    %v1141 = vpack.c.b16 %v645, %v637
    %v1142 = vpack.c.b16 %v654, %v646
    %v1143 = vpack.c.b16 %v655, %v647
    %v1144 = vpack.c.b16 %v656, %v648
    %v1145 = vpack.c.b16 %v657, %v649
    %v1146 = vpack.c.b16 %v658, %v650
    %v1147 = vpack.c.b16 %v659, %v651
    %v1148 = vpack.c.b16 %v660, %v652
    %v1149 = vpack.c.b16 %v661, %v653
    %v1150 = vpack.c.b16 %v670, %v662
    %v1151 = vpack.c.b16 %v671, %v663
    %v1152 = vpack.c.b16 %v672, %v664
    %v1153 = vpack.c.b16 %v673, %v665
    %v1154 = vpack.c.b16 %v674, %v666
    %v1155 = vpack.c.b16 %v675, %v667
    %v1156 = vpack.c.b16 %v676, %v668
    %v1157 = vpack.c.b16 %v677, %v669
    %v1158 = vpack.c.b16 %v686, %v678
    %v1159 = vpack.c.b16 %v687, %v679
    %v1160 = vpack.c.b16 %v688, %v680
    %v1161 = vpack.c.b16 %v689, %v681
    %v1162 = vpack.c.b16 %v690, %v682
    %v1163 = vpack.c.b16 %v691, %v683
    %v1164 = vpack.c.b16 %v692, %v684
    %v1165 = vpack.c.b16 %v693, %v685
    %v1166 = vpack.c.b16 %v702, %v694
    %v1167 = vpack.c.b16 %v703, %v695
    %v1168 = vpack.c.b16 %v704, %v696
    %v1169 = vpack.c.b16 %v705, %v697
    %v1170 = vpack.c.b16 %v706, %v698
    %v1171 = vpack.c.b16 %v707, %v699
    %v1172 = vpack.c.b16 %v708, %v700
    %v1173 = vpack.c.b16 %v709, %v701
    %v1174 = vpack.c.b16 %v718, %v710
    %v1175 = vpack.c.b16 %v719, %v711
    %v1176 = vpack.c.b16 %v720, %v712
    %v1177 = vpack.c.b16 %v721, %v713
    %v1178 = vpack.c.b16 %v722, %v714
    %v1179 = vpack.c.b16 %v723, %v715
    %v1180 = vpack.c.b16 %v724, %v716
    %v1181 = vpack.c.b16 %v725, %v717
    %v1182 = vpack.c.b16 %v734, %v726
    %v1183 = vpack.c.b16 %v735, %v727
    %v1184 = vpack.c.b16 %v736, %v728
    %v1185 = vpack.c.b16 %v737, %v729
    %v1186 = vpack.c.b16 %v738, %v730
    %v1187 = vpack.c.b16 %v739, %v731
    %v1188 = vpack.c.b16 %v740, %v732
    %v1189 = vpack.c.b16 %v741, %v733
    %v1190 = vpack.c.b16 %v750, %v742
    %v1191 = vpack.c.b16 %v751, %v743
    %v1192 = vpack.c.b16 %v752, %v744
    %v1193 = vpack.c.b16 %v753, %v745
    %v1194 = vpack.c.b16 %v754, %v746
    %v1195 = vpack.c.b16 %v755, %v747
    %v1196 = vpack.c.b16 %v756, %v748
    %v1197 = vpack.c.b16 %v757, %v749
    %v1198 = vpack.c.b16 %v766, %v758
    %v1199 = vpack.c.b16 %v767, %v759
    %v1200 = vpack.c.b16 %v768, %v760
    %v1201 = vpack.c.b16 %v769, %v761
    %v1202 = vpack.c.b16 %v770, %v762
    %v1203 = vpack.c.b16 %v771, %v763
    %v1204 = vpack.c.b16 %v772, %v764
    %v1205 = vpack.c.b16 %v773, %v765
    %v1206 = vpack.c.b16 %v782, %v774
    %v1207 = vpack.c.b16 %v783, %v775
    %v1208 = vpack.c.b16 %v784, %v776
    %v1209 = vpack.c.b16 %v785, %v777
    %v1210 = vpack.c.b16 %v786, %v778
    %v1211 = vpack.c.b16 %v787, %v779
    %v1212 = vpack.c.b16 %v788, %v780
    %v1213 = vpack.c.b16 %v789, %v781
    %v1214 = vpack.c.b16 %v798, %v790
    %v1215 = vpack.c.b16 %v799, %v791
    %v1216 = vpack.c.b16 %v800, %v792
    %v1217 = vpack.c.b16 %v801, %v793
    %v1218 = vpack.c.b16 %v802, %v794
    %v1219 = vpack.c.b16 %v803, %v795
    %v1220 = vpack.c.b16 %v804, %v796
    %v1221 = vpack.c.b16 %v805, %v797
    %v1222 = vpack.c.b16 %v814, %v806
    %v1223 = vpack.c.b16 %v815, %v807
    %v1224 = vpack.c.b16 %v816, %v808
    %v1225 = vpack.c.b16 %v817, %v809
    %v1226 = vpack.c.b16 %v818, %v810
    %v1227 = vpack.c.b16 %v819, %v811
    %v1228 = vpack.c.b16 %v820, %v812
    %v1229 = vpack.c.b16 %v821, %v813
    %v1230 = vpack.c.b16 %v830, %v822
    %v1231 = vpack.c.b16 %v831, %v823
    %v1232 = vpack.c.b16 %v832, %v824
    %v1233 = vpack.c.b16 %v833, %v825
    %v1234 = vpack.c.b16 %v834, %v826
    %v1235 = vpack.c.b16 %v835, %v827
    %v1236 = vpack.c.b16 %v836, %v828
    %v1237 = vpack.c.b16 %v837, %v829
    %v1238 = vpack.c.b16 %v846, %v838
    %v1239 = vpack.c.b16 %v847, %v839
    %v1240 = vpack.c.b16 %v848, %v840
    %v1241 = vpack.c.b16 %v849, %v841
    %v1242 = vpack.c.b16 %v850, %v842
    %v1243 = vpack.c.b16 %v851, %v843
    %v1244 = vpack.c.b16 %v852, %v844
    %v1245 = vpack.c.b16 %v853, %v845
    %v1246 = vpack.c.b16 %v862, %v854
    %v1247 = vpack.c.b16 %v863, %v855
    %v1248 = vpack.c.b16 %v864, %v856
    %v1249 = vpack.c.b16 %v865, %v857
    %v1250 = vpack.c.b16 %v866, %v858
    %v1251 = vpack.c.b16 %v867, %v859
    %v1252 = vpack.c.b16 %v868, %v860
    %v1253 = vpack.c.b16 %v869, %v861
    %v1254 = vpack.c.b16 %v878, %v870
    %v1255 = vpack.c.b16 %v879, %v871
    %v1256 = vpack.c.b16 %v880, %v872
    %v1257 = vpack.c.b16 %v881, %v873
    %v1258 = vpack.c.b16 %v882, %v874
    %v1259 = vpack.c.b16 %v883, %v875
    %v1260 = vpack.c.b16 %v884, %v876
    %v1261 = vpack.c.b16 %v885, %v877
    %v1262 = vpack.c.b16 %v894, %v886
    %v1263 = vpack.c.b16 %v895, %v887
    %v1264 = vpack.c.b16 %v896, %v888
    %v1265 = vpack.c.b16 %v897, %v889
    %v1266 = vpack.c.b16 %v898, %v890
    %v1267 = vpack.c.b16 %v899, %v891
    %v1268 = vpack.c.b16 %v900, %v892
    %v1269 = vpack.c.b16 %v901, %v893
    %v1270 = vpack.c.b16 %v910, %v902
    %v1271 = vpack.c.b16 %v911, %v903
    %v1272 = vpack.c.b16 %v912, %v904
    %v1273 = vpack.c.b16 %v913, %v905
    %v1274 = vpack.c.b16 %v914, %v906
    %v1275 = vpack.c.b16 %v915, %v907
    %v1276 = vpack.c.b16 %v916, %v908
    %v1277 = vpack.c.b16 %v917, %v909
    %v1278 = vpack.c.b16 %v926, %v918
    %v1279 = vpack.c.b16 %v927, %v919
    %v1280 = vpack.c.b16 %v928, %v920
    %v1281 = vpack.c.b16 %v929, %v921
    %v1282 = vpack.c.b16 %v930, %v922
    %v1283 = vpack.c.b16 %v931, %v923
    %v1284 = vpack.c.b16 %v932, %v924
    %v1285 = vpack.c.b16 %v933, %v925
    %v1286 = vpack.c.b16 %v942, %v934
    %v1287 = vpack.c.b16 %v943, %v935
    %v1288 = vpack.c.b16 %v944, %v936
    %v1289 = vpack.c.b16 %v945, %v937
    %v1290 = vpack.c.b16 %v946, %v938
    %v1291 = vpack.c.b16 %v947, %v939
    %v1292 = vpack.c.b16 %v948, %v940
    %v1293 = vpack.c.b16 %v949, %v941
    %v1294 = vpack.c.b16 %v958, %v950
    %v1295 = vpack.c.b16 %v959, %v951
    %v1296 = vpack.c.b16 %v960, %v952
    %v1297 = vpack.c.b16 %v961, %v953
    %v1298 = vpack.c.b16 %v962, %v954
    %v1299 = vpack.c.b16 %v963, %v955
    %v1300 = vpack.c.b16 %v964, %v956
    %v1301 = vpack.c.b16 %v965, %v957
    %v1302 = vpack.c.b16 %v974, %v966
    %v1303 = vpack.c.b16 %v975, %v967
    %v1304 = vpack.c.b16 %v976, %v968
    %v1305 = vpack.c.b16 %v977, %v969
    %v1306 = vpack.c.b16 %v978, %v970
    %v1307 = vpack.c.b16 %v979, %v971
    %v1308 = vpack.c.b16 %v980, %v972
    %v1309 = vpack.c.b16 %v981, %v973
    %v1310 = vpack.c.b16 %v990, %v982
    %v1311 = vpack.c.b16 %v991, %v983
    %v1312 = vpack.c.b16 %v992, %v984
    %v1313 = vpack.c.b16 %v993, %v985
    %v1314 = vpack.c.b16 %v994, %v986
    %v1315 = vpack.c.b16 %v995, %v987
    %v1316 = vpack.c.b16 %v996, %v988
    %v1317 = vpack.c.b16 %v997, %v989
    %v1318 = vpack.c.b16 %v1006, %v998
    %v1319 = vpack.c.b16 %v1007, %v999
    %v1320 = vpack.c.b16 %v1008, %v1000
    %v1321 = vpack.c.b16 %v1009, %v1001
    %v1322 = vpack.c.b16 %v1010, %v1002
    %v1323 = vpack.c.b16 %v1011, %v1003
    %v1324 = vpack.c.b16 %v1012, %v1004
    %v1325 = vpack.c.b16 %v1013, %v1005
    %v1326 = vpack.c.b16 %v1022, %v1014
    %v1327 = vpack.c.b16 %v1023, %v1015
    %v1328 = vpack.c.b16 %v1024, %v1016
    %v1329 = vpack.c.b16 %v1025, %v1017
    %v1330 = vpack.c.b16 %v1026, %v1018
    %v1331 = vpack.c.b16 %v1027, %v1019
    %v1332 = vpack.c.b16 %v1028, %v1020
    %v1333 = vpack.c.b16 %v1029, %v1021
    %v1334 = vpack.c.b16 %v1038, %v1030
    %v1335 = vpack.c.b16 %v1039, %v1031
    %v1336 = vpack.c.b16 %v1040, %v1032
    %v1337 = vpack.c.b16 %v1041, %v1033
    %v1338 = vpack.c.b16 %v1042, %v1034
    %v1339 = vpack.c.b16 %v1043, %v1035
    %v1340 = vpack.c.b16 %v1044, %v1036
    %v1341 = vpack.c.b16 %v1045, %v1037
    %v1342 = vpack.c.b16 %v1054, %v1046
    %v1343 = vpack.c.b16 %v1055, %v1047
    %v1344 = vpack.c.b16 %v1056, %v1048
    %v1345 = vpack.c.b16 %v1057, %v1049
    %v1346 = vpack.c.b16 %v1058, %v1050
    %v1347 = vpack.c.b16 %v1059, %v1051
    %v1348 = vpack.c.b16 %v1060, %v1052
    %v1349 = vpack.c.b16 %v1061, %v1053
    %v1350 = vpack.c.b16 %v1070, %v1062
    %v1351 = vpack.c.b16 %v1071, %v1063
    %v1352 = vpack.c.b16 %v1072, %v1064
    %v1353 = vpack.c.b16 %v1073, %v1065
    %v1354 = vpack.c.b16 %v1074, %v1066
    %v1355 = vpack.c.b16 %v1075, %v1067
    %v1356 = vpack.c.b16 %v1076, %v1068
    %v1357 = vpack.c.b16 %v1077, %v1069
    %v1358 = vpack.c.b16 %v1086, %v1078
    %v1359 = vpack.c.b16 %v1087, %v1079
    %v1360 = vpack.c.b16 %v1088, %v1080
    %v1361 = vpack.c.b16 %v1089, %v1081
    %v1362 = vpack.c.b16 %v1090, %v1082
    %v1363 = vpack.c.b16 %v1091, %v1083
    %v1364 = vpack.c.b16 %v1092, %v1084
    %v1365 = vpack.c.b16 %v1093, %v1085
    %v1366 = vpack.c.b16 %v1102, %v1094
    %v1367 = vpack.c.b16 %v1103, %v1095
    %v1368 = vpack.c.b16 %v1104, %v1096
    %v1369 = vpack.c.b16 %v1105, %v1097
    %v1370 = vpack.c.b16 %v1106, %v1098
    %v1371 = vpack.c.b16 %v1107, %v1099
    %v1372 = vpack.c.b16 %v1108, %v1100
    %v1373 = vpack.c.b16 %v1109, %v1101
    %v1374 = vpack.c.b16 %v1118, %v1110
    %v1375 = vpack.c.b16 %v1119, %v1111
    %v1376 = vpack.c.b16 %v1120, %v1112
    %v1377 = vpack.c.b16 %v1121, %v1113
    %v1378 = vpack.c.b16 %v1122, %v1114
    %v1379 = vpack.c.b16 %v1123, %v1115
    %v1380 = vpack.c.b16 %v1124, %v1116
    %v1381 = vpack.c.b16 %v1125, %v1117
    %1638 = vmatprep.subr.bf16.mxu0 %v1183
    %1639 = vmatpush1.bf16.msra.mxu0 %v1182
    %1640 = vmatprep.subr.bf16.mxu0 %v1175
    %1641 = vmatpush1.bf16.msra.mxu0 %v1174
    %1642 = vmatprep.subr.bf16.mxu0 %v1167
    %1643 = vmatpush1.bf16.msra.mxu0 %v1166
    %1644 = vmatprep.subr.bf16.mxu0 %v1159
    %1645 = vmatpush1.bf16.msra.mxu0 %v1158
    %1646 = vmatprep.subr.bf16.mxu0 %v1151
    %1647 = vmatpush1.bf16.msra.mxu0 %v1150
    %1648 = vmatprep.subr.bf16.mxu0 %v1143
    %1649 = vmatpush1.bf16.msra.mxu0 %v1142
    %1650 = vmatprep.subr.bf16.mxu0 %v1135
    %1651 = vmatpush1.bf16.msra.mxu0 %v1134
    %1652 = vmatprep.subr.bf16.mxu0 %v1127
    %1653 = vmatpush1.bf16.msra.mxu0 %v1126
    %1654 = vmatprep.subr.bf16.mxu0 %v1247
    %1655 = vmatpush2.bf16.msra.mxu0 %v1246
    %1656 = vmatprep.subr.bf16.mxu0 %v1239
    %1657 = vmatpush2.bf16.msra.mxu0 %v1238
    %1658 = vmatprep.subr.bf16.mxu0 %v1231
    %1659 = vmatpush2.bf16.msra.mxu0 %v1230
    %1660 = vmatprep.subr.bf16.mxu0 %v1223
    %1661 = vmatpush2.bf16.msra.mxu0 %v1222
    %1662 = vmatprep.subr.bf16.mxu0 %v1215
    %1663 = vmatpush2.bf16.msra.mxu0 %v1214
    %1664 = vmatprep.subr.bf16.mxu0 %v1207
    %1665 = vmatpush2.bf16.msra.mxu0 %v1206
    %1666 = vmatprep.subr.bf16.mxu0 %v1199
    %1667 = vmatpush2.bf16.msra.mxu0 %v1198
    %1668 = vmatprep.subr.bf16.mxu0 %v1191
    %1669 = vmatpush2.bf16.msra.mxu0 %v1190
    %1670 = vmatprep.mubr.bf16.mxu0 %v57
    %1671 = vmatmul.mubr.bf16.gmra.mxu0 %v56
    %v1672 = vpop.f32.mrf.mxu0
    %v1673 = vadd.f32 %v321, %v1672
    %v1674 = vpop.f32.mrf.mxu0
    %v1675 = vadd.f32 %v325, %v1674
    %v1676 = vpop.f32.mrf.mxu0
    %v1677 = vpop.f32.mrf.mxu0
    %1678 = vdwg.mxu0
    %1679 = vmatprep.subr.bf16.mxu0 %v1311
    %1680 = vmatpush1.bf16.msra.mxu0 %v1310
    %1681 = vmatprep.subr.bf16.mxu0 %v1303
    %1682 = vmatpush1.bf16.msra.mxu0 %v1302
    %1683 = vmatprep.subr.bf16.mxu0 %v1295
    %1684 = vmatpush1.bf16.msra.mxu0 %v1294
    %1685 = vmatprep.subr.bf16.mxu0 %v1287
    %1686 = vmatpush1.bf16.msra.mxu0 %v1286
    %1687 = vmatprep.subr.bf16.mxu0 %v1279
    %1688 = vmatpush1.bf16.msra.mxu0 %v1278
    %1689 = vmatprep.subr.bf16.mxu0 %v1271
    %1690 = vmatpush1.bf16.msra.mxu0 %v1270
    %1691 = vmatprep.subr.bf16.mxu0 %v1263
    %1692 = vmatpush1.bf16.msra.mxu0 %v1262
    %1693 = vmatprep.subr.bf16.mxu0 %v1255
    %1694 = vmatpush1.bf16.msra.mxu0 %v1254
    %1695 = vmatprep.subr.bf16.mxu0 %v1375
    %1696 = vmatpush2.bf16.msra.mxu0 %v1374
    %1697 = vmatprep.subr.bf16.mxu0 %v1367
    %1698 = vmatpush2.bf16.msra.mxu0 %v1366
    %1699 = vmatprep.subr.bf16.mxu0 %v1359
    %1700 = vmatpush2.bf16.msra.mxu0 %v1358
    %1701 = vmatprep.subr.bf16.mxu0 %v1351
    %1702 = vmatpush2.bf16.msra.mxu0 %v1350
    %1703 = vmatprep.subr.bf16.mxu0 %v1343
    %1704 = vmatpush2.bf16.msra.mxu0 %v1342
    %1705 = vmatprep.subr.bf16.mxu0 %v1335
    %1706 = vmatpush2.bf16.msra.mxu0 %v1334
    %1707 = vmatprep.subr.bf16.mxu0 %v1327
    %1708 = vmatpush2.bf16.msra.mxu0 %v1326
    %1709 = vmatprep.subr.bf16.mxu0 %v1319
    %1710 = vmatpush2.bf16.msra.mxu0 %v1318
    %1711 = vmatprep.mubr.bf16.mxu0 %v59
    %1712 = vmatmul.mubr.bf16.gmra.mxu0 %v58
    %v1713 = vpop.f32.mrf.mxu0
    %v1714 = vadd.f32 %v1673, %v1713
    %v1715 = vpop.f32.mrf.mxu0
    %v1716 = vadd.f32 %v1675, %v1715
    %v1717 = vpop.f32.mrf.mxu0
    %v1718 = vpop.f32.mrf.mxu0
    %1719 = vdwg.mxu0
    %1720 = vmatprep.subr.bf16.mxu0 %v1185
    %1721 = vmatpush1.bf16.msra.mxu0 %v1184
    %1722 = vmatprep.subr.bf16.mxu0 %v1177
    %1723 = vmatpush1.bf16.msra.mxu0 %v1176
    %1724 = vmatprep.subr.bf16.mxu0 %v1169
    %1725 = vmatpush1.bf16.msra.mxu0 %v1168
    %1726 = vmatprep.subr.bf16.mxu0 %v1161
    %1727 = vmatpush1.bf16.msra.mxu0 %v1160
    %1728 = vmatprep.subr.bf16.mxu0 %v1153
    %1729 = vmatpush1.bf16.msra.mxu0 %v1152
    %1730 = vmatprep.subr.bf16.mxu0 %v1145
    %1731 = vmatpush1.bf16.msra.mxu0 %v1144
    %1732 = vmatprep.subr.bf16.mxu0 %v1137
    %1733 = vmatpush1.bf16.msra.mxu0 %v1136
    %1734 = vmatprep.subr.bf16.mxu0 %v1129
    %1735 = vmatpush1.bf16.msra.mxu0 %v1128
    %1736 = vmatprep.subr.bf16.mxu0 %v1249
    %1737 = vmatpush2.bf16.msra.mxu0 %v1248
    %1738 = vmatprep.subr.bf16.mxu0 %v1241
    %1739 = vmatpush2.bf16.msra.mxu0 %v1240
    %1740 = vmatprep.subr.bf16.mxu0 %v1233
    %1741 = vmatpush2.bf16.msra.mxu0 %v1232
    %1742 = vmatprep.subr.bf16.mxu0 %v1225
    %1743 = vmatpush2.bf16.msra.mxu0 %v1224
    %1744 = vmatprep.subr.bf16.mxu0 %v1217
    %1745 = vmatpush2.bf16.msra.mxu0 %v1216
    %1746 = vmatprep.subr.bf16.mxu0 %v1209
    %1747 = vmatpush2.bf16.msra.mxu0 %v1208
    %1748 = vmatprep.subr.bf16.mxu0 %v1201
    %1749 = vmatpush2.bf16.msra.mxu0 %v1200
    %1750 = vmatprep.subr.bf16.mxu0 %v1193
    %1751 = vmatpush2.bf16.msra.mxu0 %v1192
    %1752 = vmatprep.mubr.bf16.mxu0 %v57
    %1753 = vmatmul.mubr.bf16.gmra.mxu0 %v56
    %v1754 = vpop.f32.mrf.mxu0
    %v1755 = vadd.f32 %v329, %v1754
    %v1756 = vpop.f32.mrf.mxu0
    %v1757 = vadd.f32 %v333, %v1756
    %v1758 = vpop.f32.mrf.mxu0
    %v1759 = vpop.f32.mrf.mxu0
    %1760 = vdwg.mxu0
    %1761 = vmatprep.subr.bf16.mxu0 %v1313
    %1762 = vmatpush1.bf16.msra.mxu0 %v1312
    %1763 = vmatprep.subr.bf16.mxu0 %v1305
    %1764 = vmatpush1.bf16.msra.mxu0 %v1304
    %1765 = vmatprep.subr.bf16.mxu0 %v1297
    %1766 = vmatpush1.bf16.msra.mxu0 %v1296
    %1767 = vmatprep.subr.bf16.mxu0 %v1289
    %1768 = vmatpush1.bf16.msra.mxu0 %v1288
    %1769 = vmatprep.subr.bf16.mxu0 %v1281
    %1770 = vmatpush1.bf16.msra.mxu0 %v1280
    %1771 = vmatprep.subr.bf16.mxu0 %v1273
    %1772 = vmatpush1.bf16.msra.mxu0 %v1272
    %1773 = vmatprep.subr.bf16.mxu0 %v1265
    %1774 = vmatpush1.bf16.msra.mxu0 %v1264
    %1775 = vmatprep.subr.bf16.mxu0 %v1257
    %1776 = vmatpush1.bf16.msra.mxu0 %v1256
    %1777 = vmatprep.subr.bf16.mxu0 %v1377
    %1778 = vmatpush2.bf16.msra.mxu0 %v1376
    %1779 = vmatprep.subr.bf16.mxu0 %v1369
    %1780 = vmatpush2.bf16.msra.mxu0 %v1368
    %1781 = vmatprep.subr.bf16.mxu0 %v1361
    %1782 = vmatpush2.bf16.msra.mxu0 %v1360
    %1783 = vmatprep.subr.bf16.mxu0 %v1353
    %1784 = vmatpush2.bf16.msra.mxu0 %v1352
    %1785 = vmatprep.subr.bf16.mxu0 %v1345
    %1786 = vmatpush2.bf16.msra.mxu0 %v1344
    %1787 = vmatprep.subr.bf16.mxu0 %v1337
    %1788 = vmatpush2.bf16.msra.mxu0 %v1336
    %1789 = vmatprep.subr.bf16.mxu0 %v1329
    %1790 = vmatpush2.bf16.msra.mxu0 %v1328
    %1791 = vmatprep.subr.bf16.mxu0 %v1321
    %1792 = vmatpush2.bf16.msra.mxu0 %v1320
    %1793 = vmatprep.mubr.bf16.mxu0 %v59
    %1794 = vmatmul.mubr.bf16.gmra.mxu0 %v58
    %v1795 = vpop.f32.mrf.mxu0
    %v1796 = vadd.f32 %v1755, %v1795
    %v1797 = vpop.f32.mrf.mxu0
    %v1798 = vadd.f32 %v1757, %v1797
    %v1799 = vpop.f32.mrf.mxu0
    %v1800 = vpop.f32.mrf.mxu0
    %1801 = vdwg.mxu0
    %1802 = vmatprep.subr.bf16.mxu0 %v1187
    %1803 = vmatpush1.bf16.msra.mxu0 %v1186
    %1804 = vmatprep.subr.bf16.mxu0 %v1179
    %1805 = vmatpush1.bf16.msra.mxu0 %v1178
    %1806 = vmatprep.subr.bf16.mxu0 %v1171
    %1807 = vmatpush1.bf16.msra.mxu0 %v1170
    %1808 = vmatprep.subr.bf16.mxu0 %v1163
    %1809 = vmatpush1.bf16.msra.mxu0 %v1162
    %1810 = vmatprep.subr.bf16.mxu0 %v1155
    %1811 = vmatpush1.bf16.msra.mxu0 %v1154
    %1812 = vmatprep.subr.bf16.mxu0 %v1147
    %1813 = vmatpush1.bf16.msra.mxu0 %v1146
    %1814 = vmatprep.subr.bf16.mxu0 %v1139
    %1815 = vmatpush1.bf16.msra.mxu0 %v1138
    %1816 = vmatprep.subr.bf16.mxu0 %v1131
    %1817 = vmatpush1.bf16.msra.mxu0 %v1130
    %1818 = vmatprep.subr.bf16.mxu0 %v1251
    %1819 = vmatpush2.bf16.msra.mxu0 %v1250
    %1820 = vmatprep.subr.bf16.mxu0 %v1243
    %1821 = vmatpush2.bf16.msra.mxu0 %v1242
    %1822 = vmatprep.subr.bf16.mxu0 %v1235
    %1823 = vmatpush2.bf16.msra.mxu0 %v1234
    %1824 = vmatprep.subr.bf16.mxu0 %v1227
    %1825 = vmatpush2.bf16.msra.mxu0 %v1226
    %1826 = vmatprep.subr.bf16.mxu0 %v1219
    %1827 = vmatpush2.bf16.msra.mxu0 %v1218
    %1828 = vmatprep.subr.bf16.mxu0 %v1211
    %1829 = vmatpush2.bf16.msra.mxu0 %v1210
    %1830 = vmatprep.subr.bf16.mxu0 %v1203
    %1831 = vmatpush2.bf16.msra.mxu0 %v1202
    %1832 = vmatprep.subr.bf16.mxu0 %v1195
    %1833 = vmatpush2.bf16.msra.mxu0 %v1194
    %1834 = vmatprep.mubr.bf16.mxu0 %v57
    %1835 = vmatmul.mubr.bf16.gmra.mxu0 %v56
    %v1836 = vpop.f32.mrf.mxu0
    %v1837 = vadd.f32 %v337, %v1836
    %v1838 = vpop.f32.mrf.mxu0
    %v1839 = vadd.f32 %v341, %v1838
    %v1840 = vpop.f32.mrf.mxu0
    %v1841 = vpop.f32.mrf.mxu0
    %1842 = vdwg.mxu0
    %1843 = vmatprep.subr.bf16.mxu0 %v1315
    %1844 = vmatpush1.bf16.msra.mxu0 %v1314
    %1845 = vmatprep.subr.bf16.mxu0 %v1307
    %1846 = vmatpush1.bf16.msra.mxu0 %v1306
    %1847 = vmatprep.subr.bf16.mxu0 %v1299
    %1848 = vmatpush1.bf16.msra.mxu0 %v1298
    %1849 = vmatprep.subr.bf16.mxu0 %v1291
    %1850 = vmatpush1.bf16.msra.mxu0 %v1290
    %1851 = vmatprep.subr.bf16.mxu0 %v1283
    %1852 = vmatpush1.bf16.msra.mxu0 %v1282
    %1853 = vmatprep.subr.bf16.mxu0 %v1275
    %1854 = vmatpush1.bf16.msra.mxu0 %v1274
    %1855 = vmatprep.subr.bf16.mxu0 %v1267
    %1856 = vmatpush1.bf16.msra.mxu0 %v1266
    %1857 = vmatprep.subr.bf16.mxu0 %v1259
    %1858 = vmatpush1.bf16.msra.mxu0 %v1258
    %1859 = vmatprep.subr.bf16.mxu0 %v1379
    %1860 = vmatpush2.bf16.msra.mxu0 %v1378
    %1861 = vmatprep.subr.bf16.mxu0 %v1371
    %1862 = vmatpush2.bf16.msra.mxu0 %v1370
    %1863 = vmatprep.subr.bf16.mxu0 %v1363
    %1864 = vmatpush2.bf16.msra.mxu0 %v1362
    %1865 = vmatprep.subr.bf16.mxu0 %v1355
    %1866 = vmatpush2.bf16.msra.mxu0 %v1354
    %1867 = vmatprep.subr.bf16.mxu0 %v1347
    %1868 = vmatpush2.bf16.msra.mxu0 %v1346
    %1869 = vmatprep.subr.bf16.mxu0 %v1339
    %1870 = vmatpush2.bf16.msra.mxu0 %v1338
    %1871 = vmatprep.subr.bf16.mxu0 %v1331
    %1872 = vmatpush2.bf16.msra.mxu0 %v1330
    %1873 = vmatprep.subr.bf16.mxu0 %v1323
    %1874 = vmatpush2.bf16.msra.mxu0 %v1322
    %1875 = vmatprep.mubr.bf16.mxu0 %v59
    %1876 = vmatmul.mubr.bf16.gmra.mxu0 %v58
    %v1877 = vpop.f32.mrf.mxu0
    %v1878 = vadd.f32 %v1837, %v1877
    %v1879 = vpop.f32.mrf.mxu0
    %v1880 = vadd.f32 %v1839, %v1879
    %v1881 = vpop.f32.mrf.mxu0
    %v1882 = vpop.f32.mrf.mxu0
    %1883 = vdwg.mxu0
    %1884 = vmatprep.subr.bf16.mxu0 %v1189
    %1885 = vmatpush1.bf16.msra.mxu0 %v1188
    %1886 = vmatprep.subr.bf16.mxu0 %v1181
    %1887 = vmatpush1.bf16.msra.mxu0 %v1180
    %1888 = vmatprep.subr.bf16.mxu0 %v1173
    %1889 = vmatpush1.bf16.msra.mxu0 %v1172
    %1890 = vmatprep.subr.bf16.mxu0 %v1165
    %1891 = vmatpush1.bf16.msra.mxu0 %v1164
    %1892 = vmatprep.subr.bf16.mxu0 %v1157
    %1893 = vmatpush1.bf16.msra.mxu0 %v1156
    %1894 = vmatprep.subr.bf16.mxu0 %v1149
    %1895 = vmatpush1.bf16.msra.mxu0 %v1148
    %1896 = vmatprep.subr.bf16.mxu0 %v1141
    %1897 = vmatpush1.bf16.msra.mxu0 %v1140
    %1898 = vmatprep.subr.bf16.mxu0 %v1133
    %1899 = vmatpush1.bf16.msra.mxu0 %v1132
    %1900 = vmatprep.subr.bf16.mxu0 %v1253
    %1901 = vmatpush2.bf16.msra.mxu0 %v1252
    %1902 = vmatprep.subr.bf16.mxu0 %v1245
    %1903 = vmatpush2.bf16.msra.mxu0 %v1244
    %1904 = vmatprep.subr.bf16.mxu0 %v1237
    %1905 = vmatpush2.bf16.msra.mxu0 %v1236
    %1906 = vmatprep.subr.bf16.mxu0 %v1229
    %1907 = vmatpush2.bf16.msra.mxu0 %v1228
    %1908 = vmatprep.subr.bf16.mxu0 %v1221
    %1909 = vmatpush2.bf16.msra.mxu0 %v1220
    %1910 = vmatprep.subr.bf16.mxu0 %v1213
    %1911 = vmatpush2.bf16.msra.mxu0 %v1212
    %1912 = vmatprep.subr.bf16.mxu0 %v1205
    %1913 = vmatpush2.bf16.msra.mxu0 %v1204
    %1914 = vmatprep.subr.bf16.mxu0 %v1197
    %1915 = vmatpush2.bf16.msra.mxu0 %v1196
    %1916 = vmatprep.mubr.bf16.mxu0 %v57
    %1917 = vmatmul.mubr.bf16.gmra.mxu0 %v56
    %v1918 = vpop.f32.mrf.mxu0
    %v1919 = vadd.f32 %v345, %v1918
    %v1920 = vpop.f32.mrf.mxu0
    %v1921 = vadd.f32 %v349, %v1920
    %v1922 = vpop.f32.mrf.mxu0
    %v1923 = vpop.f32.mrf.mxu0
    %1924 = vdwg.mxu0
    %1925 = vmatprep.subr.bf16.mxu0 %v1317
    %1926 = vmatpush1.bf16.msra.mxu0 %v1316
    %1927 = vmatprep.subr.bf16.mxu0 %v1309
    %1928 = vmatpush1.bf16.msra.mxu0 %v1308
    %1929 = vmatprep.subr.bf16.mxu0 %v1301
    %1930 = vmatpush1.bf16.msra.mxu0 %v1300
    %1931 = vmatprep.subr.bf16.mxu0 %v1293
    %1932 = vmatpush1.bf16.msra.mxu0 %v1292
    %1933 = vmatprep.subr.bf16.mxu0 %v1285
    %1934 = vmatpush1.bf16.msra.mxu0 %v1284
    %1935 = vmatprep.subr.bf16.mxu0 %v1277
    %1936 = vmatpush1.bf16.msra.mxu0 %v1276
    %1937 = vmatprep.subr.bf16.mxu0 %v1269
    %1938 = vmatpush1.bf16.msra.mxu0 %v1268
    %1939 = vmatprep.subr.bf16.mxu0 %v1261
    %1940 = vmatpush1.bf16.msra.mxu0 %v1260
    %1941 = vmatprep.subr.bf16.mxu0 %v1381
    %1942 = vmatpush2.bf16.msra.mxu0 %v1380
    %1943 = vmatprep.subr.bf16.mxu0 %v1373
    %1944 = vmatpush2.bf16.msra.mxu0 %v1372
    %1945 = vmatprep.subr.bf16.mxu0 %v1365
    %1946 = vmatpush2.bf16.msra.mxu0 %v1364
    %1947 = vmatprep.subr.bf16.mxu0 %v1357
    %1948 = vmatpush2.bf16.msra.mxu0 %v1356
    %1949 = vmatprep.subr.bf16.mxu0 %v1349
    %1950 = vmatpush2.bf16.msra.mxu0 %v1348
    %1951 = vmatprep.subr.bf16.mxu0 %v1341
    %1952 = vmatpush2.bf16.msra.mxu0 %v1340
    %1953 = vmatprep.subr.bf16.mxu0 %v1333
    %1954 = vmatpush2.bf16.msra.mxu0 %v1332
    %1955 = vmatprep.subr.bf16.mxu0 %v1325
    %1956 = vmatpush2.bf16.msra.mxu0 %v1324
    %1957 = vmatprep.mubr.bf16.mxu0 %v59
    %1958 = vmatmul.mubr.bf16.gmra.mxu0 %v58
    %v1959 = vpop.f32.mrf.mxu0
    %v1960 = vadd.f32 %v1919, %v1959
    %v1961 = vpop.f32.mrf.mxu0
    %v1962 = vadd.f32 %v1921, %v1961
    %v1963 = vpop.f32.mrf.mxu0
    %v1964 = vpop.f32.mrf.mxu0
    %1965 = vdwg.mxu0
    %1966 = vst [vmem:[#allocation8] sm:$0xff] %v1714
    %1967 = vst [vmem:[#allocation8 + $0x8] sm:$0xff] %v1716
    %1968 = vst [vmem:[#allocation8 + $0x10] sm:$0xff] %v1796
    %1969 = vst [vmem:[#allocation8 + $0x18] sm:$0xff] %v1798
    %1970 = vst [vmem:[#allocation8 + $0x20] sm:$0xff] %v1878
    %1971 = vst [vmem:[#allocation8 + $0x28] sm:$0xff] %v1880
    %1972 = vst [vmem:[#allocation8 + $0x30] sm:$0xff] %v1960
    %1973 = vst [vmem:[#allocation8 + $0x38] sm:$0xff] %v1962
    // Predicated region
    $region26: #{_linear_call.1} parent=1 // pred_check
      _
    $region27: #{_linear_call.1} parent=1 // pred_check_branch
      %1975 = sbr.rel (0) target = $region29
    $region28: #{_linear_call.1} parent=1 // pred_region
      %s1977 = ssub.s32 1024, 1024
      %1978 = vsyncadd [#allocation4], %s1977
      %s1980 = sshll.u32 [#allocation8], 4
      %s1981 = int_to_ptr.vmem [resolvable:$true] %s1980
      %1983 = dma.vmem_to_hbm [thread:$0]  %s1981, 1024, %s3, [#allocation4]
    $region29: #{_linear_call.1} parent=1 // pred_fallthru
      _
    // Predicated region
    $region30: #{_linear_call.1} parent=1 // pred_check
      _
    $region31: #{_linear_call.1} parent=1 // pred_check_branch
      %1985 = sbr.rel (0) target = $region33
    $region32: #{_linear_call.1} parent=1 // pred_region
      %1986 = dma.done [#allocation4], 1024
    $region33: #{_linear_call.1} parent=1 // pred_fallthru
      _
    %1987 = vsyncpa [#allocation3], 1
    %1988 = vsyncpa [#allocation6], 1
    %1989 = vsyncpa [#allocation4], 1

</llo_original>
